<compile_context>
chip_gen: v7x
topology: tpu7x:2x2x1
jax: 0.10.0
libtpu: 0.0.40
codegen_flags: <defaults>
</compile_context>

<pallas_src>
import functools

import jax
import jax.numpy as jnp
from jax.experimental import pallas as pl
from jax.experimental.pallas import tpu as pltpu


# ---------------------------------------------------------------------------
# Fused kernel: input GEMM -> unrolled LSTM recurrence -> output GEMM -> log-softmax
# ---------------------------------------------------------------------------
def _fused_lstm_kernel(x_ref, h0_ref, c0_ref, wih_ref, whh_ref, b_ref,
                       wout_ref, bout_ref,
                       out_ref, hn_ref, cn_ref,
                       gin_scr, hs_scr):
    Bp, H = h0_ref.shape                      # Bp is sublane-padded (multiple of 8)
    TBp = x_ref.shape[0]
    T = TBp // Bp
    G = wih_ref.shape[1]                      # 4H (== 128 lanes for H=32)
    f32 = jnp.float32

    # ---- hoisted once (outside the recurrence) ----
    bias = b_ref[...]                         # (1, 4H) f32
    w_hh = whh_ref[...]                       # (H, 4H) bf16

    # All-timestep input projection as one MXU GEMM, stored to VMEM scratch so the
    # (T*Bp, 4H) f32 value is NOT kept live in vregs across the unrolled loop.
    gin_scr[...] = jnp.dot(x_ref[...], wih_ref[...],
                           preferred_element_type=f32) + bias        # (T*Bp, 4H)

    # Lane mask for the 'g' (cell candidate) gate region [2H, 3H); hoisted.
    lane = jax.lax.broadcasted_iota(jnp.int32, (Bp, G), dimension=1)
    g_mask = (lane >= 2 * H) & (lane < 3 * H)
    # tanh(x) = 2*sigmoid(2x) - 1  -> pre-scale g lanes by 2 so ONE full-vreg sigmoid
    # per step replaces sigmoid + tanh (halves EUP pushes on the serial path).
    gate_scale = jnp.where(g_mask, jnp.float32(2.0), jnp.float32(1.0))

    h = h0_ref[...]                           # (Bp, H) f32
    c = c0_ref[...]                           # (Bp, H) f32

    # Whole sequence in one grid step; T is small & static -> fully unrolled, all
    # slices static and sublane-aligned (starts are multiples of Bp=8).
    for t in range(T):
        r0 = t * Bp
        gates = gin_scr[r0:r0 + Bp, :] + jnp.dot(
            h.astype(w_hh.dtype), w_hh, preferred_element_type=f32)   # (Bp, 4H) f32

        s = jax.nn.sigmoid(gates * gate_scale)            # single EUP transcendental
        act = jnp.where(g_mask, 2.0 * s - 1.0, s)         # g lanes: tanh via sigmoid
        i_g = act[:, 0 * H:1 * H]
        f_g = act[:, 1 * H:2 * H]
        g_g = act[:, 2 * H:3 * H]
        o_g = act[:, 3 * H:4 * H]

        c = f_g * c + i_g * g_g
        h = o_g * jnp.tanh(c)

        # One contiguous, tile-aligned, unmasked (Bp, H) store per step (time-major).
        hs_scr[r0:r0 + Bp, :] = h

    # Final state written exactly once (aliased onto h0/c0 buffers by the wrapper).
    hn_ref[...] = h
    cn_ref[...] = c

    # ---- fused output projection + log-softmax over the lane-dense padded vocab ----
    hs = hs_scr[...]                                                  # (T*Bp, H) f32
    logits = jnp.dot(hs.astype(wout_ref.dtype), wout_ref[...],
                     preferred_element_type=f32) + bout_ref[...]      # (T*Bp, Vp) f32
    m = jnp.max(logits, axis=-1, keepdims=True)        # padded lanes carry -1e30 bias
    z = logits - m
    lse = jnp.log(jnp.sum(jnp.exp(z), axis=-1, keepdims=True))
    out_ref[...] = z - lse


# ---------------------------------------------------------------------------
# One-time parameter preprocessing (NOT per call): bf16 casts + lane-padded head
# ---------------------------------------------------------------------------
def prepare_params(params):
    bf16 = jnp.bfloat16
    f32 = jnp.float32
    H, V = params["w_out"].shape
    Vp = ((V + 127) // 128) * 128                       # lane-dense vocab (>=128)
    w_out_p = jnp.zeros((H, Vp), f32).at[:, :V].set(params["w_out"]).astype(bf16)
    # Padded logit lanes get a large negative bias so exp-sum / log-softmax is exact.
    b_out_p = jnp.full((1, Vp), -1e30, f32).at[:, :V].set(params["b_out"])
    return {
        "emb": params["emb"].astype(bf16),
        "w_ih": params["w_ih"].astype(bf16),
        "w_hh": params["w_hh"].astype(bf16),
        "b_lstm": params["b_lstm"].astype(f32),
        "w_out_p": w_out_p,
        "b_out_p": b_out_p,
    }


# ---------------------------------------------------------------------------
# Full forward pass (only the tiny embedding gather + output transpose stay in XLA)
# ---------------------------------------------------------------------------
def lstm_network_forward(pp, x_tokens, prev_state, batch_size, vocab_size):
    B, T = x_tokens.shape
    E = pp["emb"].shape[1]
    H = pp["w_hh"].shape[0]
    Vp = pp["w_out_p"].shape[1]
    f32 = jnp.float32

    Bp = ((B + 7) // 8) * 8          # pad batch to f32 sublane multiple -> aligned
                                     # per-step tiles, full unmasked stores
    # NOTE(perf): for real workloads pack many more sequences so M fills the MXU
    # (>=8 rows minimum, ideally 128-256); padded rows here are pure throwaway work.

    # Embedding gather emitted directly in time-major order (row = t*Bp + b);
    # padded batch rows use token 0 and are discarded after the kernel.
    # TODO(synk): move this gather in-kernel (scalar-prefetch token ids + row DMAs)
    # to avoid the HBM write+read of the embedded activations at production T*B*E.
    idx = jnp.zeros((T, Bp), jnp.int32).at[:, :B].set(jnp.transpose(x_tokens, (1, 0)))
    x_all = jnp.take(pp["emb"], idx.reshape(-1), axis=0)              # (T*Bp, E) bf16

    h0, c0 = prev_state                                               # each (1, B, H)
    h0p = jnp.zeros((Bp, H), f32).at[:B, :].set(h0[0])
    c0p = jnp.zeros((Bp, H), f32).at[:B, :].set(c0[0])

    # TODO(synk): for production T/B, tile the sequence over an 'arbitrary' grid axis
    # (h/c carried in scratch, init via pl.when) and add a leading 'parallel' batch
    # axis so v7x's second TensorCore runs an independent batch half; at these tiny
    # shapes everything is fully VMEM-resident (<1 MiB) so a single grid step wins.
    out, h_n, c_n = pl.pallas_call(
        _fused_lstm_kernel,
        out_shape=(
            jax.ShapeDtypeStruct((T * Bp, Vp), f32),   # log-probs, time-major rows
            jax.ShapeDtypeStruct((Bp, H), f32),        # h_n
            jax.ShapeDtypeStruct((Bp, H), f32),        # c_n
        ),
        grid=(1,),
        in_specs=[
            pl.BlockSpec((T * Bp, E), lambda i: (0, 0)),   # embedded tokens (bf16)
            pl.BlockSpec((Bp, H), lambda i: (0, 0)),        # h0
            pl.BlockSpec((Bp, H), lambda i: (0, 0)),        # c0
            pl.BlockSpec((E, 4 * H), lambda i: (0, 0)),     # W_ih (bf16)
            pl.BlockSpec((H, 4 * H), lambda i: (0, 0)),     # W_hh (bf16)
            pl.BlockSpec((1, 4 * H), lambda i: (0, 0)),     # bias (f32)
            pl.BlockSpec((H, Vp), lambda i: (0, 0)),        # W_out padded (bf16)
            pl.BlockSpec((1, Vp), lambda i: (0, 0)),        # b_out padded (f32)
        ],
        out_specs=(
            pl.BlockSpec((T * Bp, Vp), lambda i: (0, 0)),
            pl.BlockSpec((Bp, H), lambda i: (0, 0)),
            pl.BlockSpec((Bp, H), lambda i: (0, 0)),
        ),
        scratch_shapes=[
            pltpu.VMEM((T * Bp, 4 * H), jnp.float32),   # input projection (per-step reads)
            pltpu.VMEM((T * Bp, H), jnp.float32),       # hidden states, time-major
        ],
        input_output_aliases={1: 1, 2: 2},              # h0 -> h_n, c0 -> c_n
        compiler_params=pltpu.CompilerParams(
            dimension_semantics=("arbitrary",),
            # Resident buffers total well under 1 MiB at these shapes; re-derive when
            # scaling T/B (v5e default scoped 16 MiB, v6e 32, v7x 32 of 64 physical).
            vmem_limit_bytes=16 * 1024 * 1024),
    )(x_all, h0p, c0p, pp["w_ih"], pp["w_hh"], pp["b_lstm"],
      pp["w_out_p"], pp["b_out_p"])

    # Time-major -> (B, T, V): slice off batch/vocab padding, one tiny XLA transpose.
    log_probs = out.reshape(T, Bp, Vp)[:, :batch_size, :vocab_size].transpose(1, 0, 2)
    return log_probs, (h_n[:batch_size][None], c_n[:batch_size][None])


# ---------------------------------------------------------------------------
# Pure-JAX f32 reference (same math, for correctness check)
# ---------------------------------------------------------------------------
def _reference_forward(params, x_tokens, prev_state, batch_size):
    x = jnp.take(params["emb"], x_tokens, axis=0)          # (B, T, E)
    h = prev_state[0][0]
    c = prev_state[1][0]
    H = h.shape[-1]
    T = x.shape[1]
    hs = []
    for t in range(T):
        gates = (x[:, t, :] @ params["w_ih"] + h @ params["w_hh"]
                 + params["b_lstm"])
        i_g = jax.nn.sigmoid(gates[:, 0 * H:1 * H])
        f_g = jax.nn.sigmoid(gates[:, 1 * H:2 * H])
        g_g = jnp.tanh(gates[:, 2 * H:3 * H])
        o_g = jax.nn.sigmoid(gates[:, 3 * H:4 * H])
        c = f_g * c + i_g * g_g
        h = o_g * jnp.tanh(c)
        hs.append(h)
    h_bt = jnp.stack(hs, axis=1).reshape(-1, H)            # (B*T, H), (b, t) order
    logits = h_bt @ params["w_out"] + params["b_out"]
    logp = jax.nn.log_softmax(logits, axis=-1)
    return logp.reshape(batch_size, -1, logits.shape[-1]), (h[None], c[None])


# ---------------------------------------------------------------------------
# Deterministic parameter init (matches shapes / init of the PyTorch module)
# ---------------------------------------------------------------------------
def init_params(key, input_size, embedding_size, lstm_size):
    k_emb, k_ih, k_hh, k_bih, k_bhh, k_out = jax.random.split(key, 6)
    initrange = 0.1
    stdv = 1.0 / jnp.sqrt(jnp.float32(lstm_size))
    f32 = jnp.float32
    return {
        "emb": jax.random.uniform(k_emb, (input_size, embedding_size), f32,
                                  -initrange, initrange),
        # stored transposed: (in, 4H); gate order i, f, g, o
        "w_ih": jax.random.uniform(k_ih, (embedding_size, 4 * lstm_size), f32,
                                   -stdv, stdv),
        "w_hh": jax.random.uniform(k_hh, (lstm_size, 4 * lstm_size), f32,
                                   -stdv, stdv),
        "b_lstm": (jax.random.uniform(k_bih, (1, 4 * lstm_size), f32, -stdv, stdv)
                   + jax.random.uniform(k_bhh, (1, 4 * lstm_size), f32, -stdv, stdv)),
        "w_out": jax.random.uniform(k_out, (lstm_size, input_size), f32,
                                    -initrange, initrange),
        "b_out": jnp.zeros((1, input_size), f32),
    }


if __name__ == "__main__":
    # small shapes: vocab=16, seq=8, hidden=32, embedding=32, batch=2
    INPUT_SIZE = 16     # vocab
    SEQ = 8
    LSTM_SIZE = 32
    EMB_SIZE = 32
    BATCH = 2

    key = jax.random.PRNGKey(0)
    k_params, k_tokens = jax.random.split(key)
    params = init_params(k_params, INPUT_SIZE, EMB_SIZE, LSTM_SIZE)
    pp = prepare_params(params)          # one-time bf16 cast + lane-padded head

    x_tokens = jax.random.randint(k_tokens, (BATCH, SEQ), 0, INPUT_SIZE, jnp.int32)
    h0 = jnp.zeros((1, BATCH, LSTM_SIZE), jnp.float32)
    c0 = jnp.zeros((1, BATCH, LSTM_SIZE), jnp.float32)

    fwd = jax.jit(functools.partial(lstm_network_forward,
                                    batch_size=BATCH, vocab_size=INPUT_SIZE))
    log_probs, (h_n, c_n) = fwd(pp, x_tokens, (h0, c0))
    jax.block_until_ready((log_probs, h_n, c_n))

    # shape checks
    assert log_probs.shape == (BATCH, SEQ, INPUT_SIZE)
    assert h_n.shape == (1, BATCH, LSTM_SIZE) and c_n.shape == (1, BATCH, LSTM_SIZE)
    # log_softmax rows must exponentiate-sum to ~1 (padded vocab lanes contribute 0)
    assert jnp.allclose(jnp.sum(jnp.exp(log_probs), axis=-1), 1.0, atol=1e-4)

    # numerical check vs pure-JAX f32 reference (bf16 MXU operands -> loose tolerance)
    ref_lp, (ref_h, ref_c) = _reference_forward(params, x_tokens, (h0, c0), BATCH)
    assert jnp.allclose(log_probs, ref_lp, atol=5e-2), "log-probs mismatch vs reference"
    assert jnp.allclose(h_n, ref_h, atol=5e-2) and jnp.allclose(c_n, ref_c, atol=5e-2)

    print("KERNEL_OK")
</pallas_src>

<mosaic_0001>
module attributes {stable_mosaic.version = 11 : i64} {
  func.func @_fused_lstm_kernel(%arg0: i32, %arg1: memref<64x32xbf16, #tpu.memory_space<vmem>>, %arg2: memref<8x32xf32, #tpu.memory_space<vmem>>, %arg3: memref<8x32xf32, #tpu.memory_space<vmem>>, %arg4: memref<32x128xbf16, #tpu.memory_space<vmem>>, %arg5: memref<32x128xbf16, #tpu.memory_space<vmem>>, %arg6: memref<1x128xf32, #tpu.memory_space<vmem>>, %arg7: memref<32x128xbf16, #tpu.memory_space<vmem>>, %arg8: memref<1x128xf32, #tpu.memory_space<vmem>>, %arg9: memref<64x128xf32, #tpu.memory_space<vmem>>, %arg10: memref<8x32xf32, #tpu.memory_space<vmem>>, %arg11: memref<8x32xf32, #tpu.memory_space<vmem>>, %arg12: memref<64x128xf32, #tpu.memory_space<vmem>>, %arg13: memref<64x32xf32, #tpu.memory_space<vmem>>) attributes {dimension_semantics = [#tpu.dimension_semantics<arbitrary>], iteration_bounds = array<i64: 1>, scalar_prefetch = 0 : i64, scratch_operands = 2 : i64, tpu.core_type = #tpu.core_type<tc>, window_params = [{pipeline_mode = #tpu.pipeline_mode<synchronous>, transform_indices = @transform_0, window_bounds = array<i64: 64, 32>}, {pipeline_mode = #tpu.pipeline_mode<synchronous>, transform_indices = @transform_1, window_bounds = array<i64: 8, 32>}, {pipeline_mode = #tpu.pipeline_mode<synchronous>, transform_indices = @transform_2, window_bounds = array<i64: 8, 32>}, {pipeline_mode = #tpu.pipeline_mode<synchronous>, transform_indices = @transform_3, window_bounds = array<i64: 32, 128>}, {pipeline_mode = #tpu.pipeline_mode<synchronous>, transform_indices = @transform_4, window_bounds = array<i64: 32, 128>}, {pipeline_mode = #tpu.pipeline_mode<synchronous>, transform_indices = @transform_5, window_bounds = array<i64: 1, 128>}, {pipeline_mode = #tpu.pipeline_mode<synchronous>, transform_indices = @transform_6, window_bounds = array<i64: 32, 128>}, {pipeline_mode = #tpu.pipeline_mode<synchronous>, transform_indices = @transform_7, window_bounds = array<i64: 1, 128>}, {pipeline_mode = #tpu.pipeline_mode<synchronous>, transform_indices = @transform_8, window_bounds = array<i64: 64, 128>}, {pipeline_mode = #tpu.pipeline_mode<synchronous>, transform_indices = @transform_9, window_bounds = array<i64: 8, 32>}, {pipeline_mode = #tpu.pipeline_mode<synchronous>, transform_indices = @transform_10, window_bounds = array<i64: 8, 32>}]} {
    %c0 = arith.constant 0 : index
    %c0_0 = arith.constant 0 : index
    %0 = vector.load %arg6[%c0, %c0_0] : memref<1x128xf32, #tpu.memory_space<vmem>>, vector<1x128xf32>
    %c0_1 = arith.constant 0 : index
    %c0_2 = arith.constant 0 : index
    %1 = vector.load %arg5[%c0_1, %c0_2] : memref<32x128xbf16, #tpu.memory_space<vmem>>, vector<32x128xbf16>
    %c0_3 = arith.constant 0 : index
    %c0_4 = arith.constant 0 : index
    %2 = vector.load %arg1[%c0_3, %c0_4] : memref<64x32xbf16, #tpu.memory_space<vmem>>, vector<64x32xbf16>
    %c0_5 = arith.constant 0 : index
    %c0_6 = arith.constant 0 : index
    %3 = vector.load %arg4[%c0_5, %c0_6] : memref<32x128xbf16, #tpu.memory_space<vmem>>, vector<32x128xbf16>
    %cst = arith.constant dense<0.000000e+00> : vector<64x128xf32>
    %4 = tpu.matmul %2, %3, %cst {dimension_numbers = #tpu.dot_dimension_numbers<[1], [0], [0], [1], [0, 0, 1, 1], [], []>} : vector<64x32xbf16>, vector<32x128xbf16>, vector<64x128xf32> -> vector<64x128xf32>
    %5 = vector.broadcast %0 : vector<1x128xf32> to vector<64x128xf32>
    %6 = arith.addf %4, %5 : vector<64x128xf32>
    %c0_7 = arith.constant 0 : index
    %c0_8 = arith.constant 0 : index
    %7 = vector.load %arg12[%c0_7, %c0_8] : memref<64x128xf32, #tpu.memory_space<vmem>>, vector<64x128xf32>
    tpu.vector_store %arg12[%c0_7, %c0_8], %6 {strides = array<i32>} : memref<64x128xf32, #tpu.memory_space<vmem>>, vector<64x128xf32>,
    %8 = tpu.iota {dimensions = array<i32: 1>} : vector<8x128xi32>
    %c64_i32 = arith.constant 64 : i32
    %9 = vector.broadcast %c64_i32 : i32 to vector<8x128xi32>
    %10 = arith.cmpi sge, %8, %9 : vector<8x128xi32>
    %c96_i32 = arith.constant 96 : i32
    %11 = vector.broadcast %c96_i32 : i32 to vector<8x128xi32>
    %12 = arith.cmpi slt, %8, %11 : vector<8x128xi32>
    %13 = arith.andi %10, %12 : vector<8x128xi1>
    %cst_9 = arith.constant 2.000000e+00 : f32
    %cst_10 = arith.constant 1.000000e+00 : f32
    %14 = vector.broadcast %cst_9 : f32 to vector<8x128xf32>
    %15 = vector.broadcast %cst_10 : f32 to vector<8x128xf32>
    %16 = arith.select %13, %14, %15 : vector<8x128xi1>, vector<8x128xf32>
    %c0_11 = arith.constant 0 : index
    %c0_12 = arith.constant 0 : index
    %17 = vector.load %arg2[%c0_11, %c0_12] : memref<8x32xf32, #tpu.memory_space<vmem>>, vector<8x32xf32>
    %c0_13 = arith.constant 0 : index
    %c0_14 = arith.constant 0 : index
    %18 = vector.load %arg3[%c0_13, %c0_14] : memref<8x32xf32, #tpu.memory_space<vmem>>, vector<8x32xf32>
    %c0_15 = arith.constant 0 : index
    %c0_16 = arith.constant 0 : index
    %19 = vector.load %arg12[%c0_15, %c0_16] : memref<64x128xf32, #tpu.memory_space<vmem>>, vector<8x128xf32>
    %20 = arith.truncf %17 : vector<8x32xf32> to vector<8x32xbf16>
    %cst_17 = arith.constant dense<0.000000e+00> : vector<8x128xf32>
    %21 = tpu.matmul %20, %1, %cst_17 {dimension_numbers = #tpu.dot_dimension_numbers<[1], [0], [0], [1], [0, 0, 1, 1], [], []>} : vector<8x32xbf16>, vector<32x128xbf16>, vector<8x128xf32> -> vector<8x128xf32>
    %22 = arith.addf %19, %21 : vector<8x128xf32>
    %23 = arith.mulf %22, %16 : vector<8x128xf32>
    %24 = arith.negf %23 : vector<8x128xf32>
    %25 = math.exp %24 : vector<8x128xf32>
    %cst_18 = arith.constant 1.000000e+00 : f32
    %26 = vector.broadcast %cst_18 : f32 to vector<8x128xf32>
    %27 = arith.addf %26, %25 : vector<8x128xf32>
    %28 = arith.divf %26, %27 : vector<8x128xf32>
    %cst_19 = arith.constant 2.000000e+00 : f32
    %29 = vector.broadcast %cst_19 : f32 to vector<8x128xf32>
    %30 = arith.mulf %29, %28 : vector<8x128xf32>
    %cst_20 = arith.constant 1.000000e+00 : f32
    %31 = vector.broadcast %cst_20 : f32 to vector<8x128xf32>
    %32 = arith.subf %30, %31 : vector<8x128xf32>
    %33 = arith.select %13, %32, %28 : vector<8x128xi1>, vector<8x128xf32>
    %34 = vector.extract_strided_slice %33 {offsets = [0, 0], sizes = [8, 32], strides = [1, 1]} : vector<8x128xf32> to vector<8x32xf32>
    %35 = vector.extract_strided_slice %33 {offsets = [0, 32], sizes = [8, 32], strides = [1, 1]} : vector<8x128xf32> to vector<8x32xf32>
    %36 = vector.extract_strided_slice %33 {offsets = [0, 64], sizes = [8, 32], strides = [1, 1]} : vector<8x128xf32> to vector<8x32xf32>
    %37 = vector.extract_strided_slice %33 {offsets = [0, 96], sizes = [8, 32], strides = [1, 1]} : vector<8x128xf32> to vector<8x32xf32>
    %38 = arith.mulf %35, %18 : vector<8x32xf32>
    %39 = arith.mulf %34, %36 : vector<8x32xf32>
    %40 = arith.addf %38, %39 : vector<8x32xf32>
    %41 = math.tanh %40 : vector<8x32xf32>
    %42 = arith.mulf %37, %41 : vector<8x32xf32>
    %c0_21 = arith.constant 0 : index
    %c0_22 = arith.constant 0 : index
    %43 = vector.load %arg13[%c0_21, %c0_22] : memref<64x32xf32, #tpu.memory_space<vmem>>, vector<8x32xf32>
    tpu.vector_store %arg13[%c0_21, %c0_22], %42 {strides = array<i32>} : memref<64x32xf32, #tpu.memory_space<vmem>>, vector<8x32xf32>,
    %c8 = arith.constant 8 : index
    %c0_23 = arith.constant 0 : index
    %44 = vector.load %arg12[%c8, %c0_23] : memref<64x128xf32, #tpu.memory_space<vmem>>, vector<8x128xf32>
    %45 = arith.truncf %42 : vector<8x32xf32> to vector<8x32xbf16>
    %cst_24 = arith.constant dense<0.000000e+00> : vector<8x128xf32>
    %46 = tpu.matmul %45, %1, %cst_24 {dimension_numbers = #tpu.dot_dimension_numbers<[1], [0], [0], [1], [0, 0, 1, 1], [], []>} : vector<8x32xbf16>, vector<32x128xbf16>, vector<8x128xf32> -> vector<8x128xf32>
    %47 = arith.addf %44, %46 : vector<8x128xf32>
    %48 = arith.mulf %47, %16 : vector<8x128xf32>
    %49 = arith.negf %48 : vector<8x128xf32>
    %50 = math.exp %49 : vector<8x128xf32>
    %cst_25 = arith.constant 1.000000e+00 : f32
    %51 = vector.broadcast %cst_25 : f32 to vector<8x128xf32>
    %52 = arith.addf %51, %50 : vector<8x128xf32>
    %53 = arith.divf %51, %52 : vector<8x128xf32>
    %cst_26 = arith.constant 2.000000e+00 : f32
    %54 = vector.broadcast %cst_26 : f32 to vector<8x128xf32>
    %55 = arith.mulf %54, %53 : vector<8x128xf32>
    %cst_27 = arith.constant 1.000000e+00 : f32
    %56 = vector.broadcast %cst_27 : f32 to vector<8x128xf32>
    %57 = arith.subf %55, %56 : vector<8x128xf32>
    %58 = arith.select %13, %57, %53 : vector<8x128xi1>, vector<8x128xf32>
    %59 = vector.extract_strided_slice %58 {offsets = [0, 0], sizes = [8, 32], strides = [1, 1]} : vector<8x128xf32> to vector<8x32xf32>
    %60 = vector.extract_strided_slice %58 {offsets = [0, 32], sizes = [8, 32], strides = [1, 1]} : vector<8x128xf32> to vector<8x32xf32>
    %61 = vector.extract_strided_slice %58 {offsets = [0, 64], sizes = [8, 32], strides = [1, 1]} : vector<8x128xf32> to vector<8x32xf32>
    %62 = vector.extract_strided_slice %58 {offsets = [0, 96], sizes = [8, 32], strides = [1, 1]} : vector<8x128xf32> to vector<8x32xf32>
    %63 = arith.mulf %60, %40 : vector<8x32xf32>
    %64 = arith.mulf %59, %61 : vector<8x32xf32>
    %65 = arith.addf %63, %64 : vector<8x32xf32>
    %66 = math.tanh %65 : vector<8x32xf32>
    %67 = arith.mulf %62, %66 : vector<8x32xf32>
    %c8_28 = arith.constant 8 : index
    %c0_29 = arith.constant 0 : index
    %68 = vector.load %arg13[%c8_28, %c0_29] : memref<64x32xf32, #tpu.memory_space<vmem>>, vector<8x32xf32>
    tpu.vector_store %arg13[%c8_28, %c0_29], %67 {strides = array<i32>} : memref<64x32xf32, #tpu.memory_space<vmem>>, vector<8x32xf32>,
    %c16 = arith.constant 16 : index
    %c0_30 = arith.constant 0 : index
    %69 = vector.load %arg12[%c16, %c0_30] : memref<64x128xf32, #tpu.memory_space<vmem>>, vector<8x128xf32>
    %70 = arith.truncf %67 : vector<8x32xf32> to vector<8x32xbf16>
    %cst_31 = arith.constant dense<0.000000e+00> : vector<8x128xf32>
    %71 = tpu.matmul %70, %1, %cst_31 {dimension_numbers = #tpu.dot_dimension_numbers<[1], [0], [0], [1], [0, 0, 1, 1], [], []>} : vector<8x32xbf16>, vector<32x128xbf16>, vector<8x128xf32> -> vector<8x128xf32>
    %72 = arith.addf %69, %71 : vector<8x128xf32>
    %73 = arith.mulf %72, %16 : vector<8x128xf32>
    %74 = arith.negf %73 : vector<8x128xf32>
    %75 = math.exp %74 : vector<8x128xf32>
    %cst_32 = arith.constant 1.000000e+00 : f32
    %76 = vector.broadcast %cst_32 : f32 to vector<8x128xf32>
    %77 = arith.addf %76, %75 : vector<8x128xf32>
    %78 = arith.divf %76, %77 : vector<8x128xf32>
    %cst_33 = arith.constant 2.000000e+00 : f32
    %79 = vector.broadcast %cst_33 : f32 to vector<8x128xf32>
    %80 = arith.mulf %79, %78 : vector<8x128xf32>
    %cst_34 = arith.constant 1.000000e+00 : f32
    %81 = vector.broadcast %cst_34 : f32 to vector<8x128xf32>
    %82 = arith.subf %80, %81 : vector<8x128xf32>
    %83 = arith.select %13, %82, %78 : vector<8x128xi1>, vector<8x128xf32>
    %84 = vector.extract_strided_slice %83 {offsets = [0, 0], sizes = [8, 32], strides = [1, 1]} : vector<8x128xf32> to vector<8x32xf32>
    %85 = vector.extract_strided_slice %83 {offsets = [0, 32], sizes = [8, 32], strides = [1, 1]} : vector<8x128xf32> to vector<8x32xf32>
    %86 = vector.extract_strided_slice %83 {offsets = [0, 64], sizes = [8, 32], strides = [1, 1]} : vector<8x128xf32> to vector<8x32xf32>
    %87 = vector.extract_strided_slice %83 {offsets = [0, 96], sizes = [8, 32], strides = [1, 1]} : vector<8x128xf32> to vector<8x32xf32>
    %88 = arith.mulf %85, %65 : vector<8x32xf32>
    %89 = arith.mulf %84, %86 : vector<8x32xf32>
    %90 = arith.addf %88, %89 : vector<8x32xf32>
    %91 = math.tanh %90 : vector<8x32xf32>
    %92 = arith.mulf %87, %91 : vector<8x32xf32>
    %c16_35 = arith.constant 16 : index
    %c0_36 = arith.constant 0 : index
    %93 = vector.load %arg13[%c16_35, %c0_36] : memref<64x32xf32, #tpu.memory_space<vmem>>, vector<8x32xf32>
    tpu.vector_store %arg13[%c16_35, %c0_36], %92 {strides = array<i32>} : memref<64x32xf32, #tpu.memory_space<vmem>>, vector<8x32xf32>,
    %c24 = arith.constant 24 : index
    %c0_37 = arith.constant 0 : index
    %94 = vector.load %arg12[%c24, %c0_37] : memref<64x128xf32, #tpu.memory_space<vmem>>, vector<8x128xf32>
    %95 = arith.truncf %92 : vector<8x32xf32> to vector<8x32xbf16>
    %cst_38 = arith.constant dense<0.000000e+00> : vector<8x128xf32>
    %96 = tpu.matmul %95, %1, %cst_38 {dimension_numbers = #tpu.dot_dimension_numbers<[1], [0], [0], [1], [0, 0, 1, 1], [], []>} : vector<8x32xbf16>, vector<32x128xbf16>, vector<8x128xf32> -> vector<8x128xf32>
    %97 = arith.addf %94, %96 : vector<8x128xf32>
    %98 = arith.mulf %97, %16 : vector<8x128xf32>
    %99 = arith.negf %98 : vector<8x128xf32>
    %100 = math.exp %99 : vector<8x128xf32>
    %cst_39 = arith.constant 1.000000e+00 : f32
    %101 = vector.broadcast %cst_39 : f32 to vector<8x128xf32>
    %102 = arith.addf %101, %100 : vector<8x128xf32>
    %103 = arith.divf %101, %102 : vector<8x128xf32>
    %cst_40 = arith.constant 2.000000e+00 : f32
    %104 = vector.broadcast %cst_40 : f32 to vector<8x128xf32>
    %105 = arith.mulf %104, %103 : vector<8x128xf32>
    %cst_41 = arith.constant 1.000000e+00 : f32
    %106 = vector.broadcast %cst_41 : f32 to vector<8x128xf32>
    %107 = arith.subf %105, %106 : vector<8x128xf32>
    %108 = arith.select %13, %107, %103 : vector<8x128xi1>, vector<8x128xf32>
    %109 = vector.extract_strided_slice %108 {offsets = [0, 0], sizes = [8, 32], strides = [1, 1]} : vector<8x128xf32> to vector<8x32xf32>
    %110 = vector.extract_strided_slice %108 {offsets = [0, 32], sizes = [8, 32], strides = [1, 1]} : vector<8x128xf32> to vector<8x32xf32>
    %111 = vector.extract_strided_slice %108 {offsets = [0, 64], sizes = [8, 32], strides = [1, 1]} : vector<8x128xf32> to vector<8x32xf32>
    %112 = vector.extract_strided_slice %108 {offsets = [0, 96], sizes = [8, 32], strides = [1, 1]} : vector<8x128xf32> to vector<8x32xf32>
    %113 = arith.mulf %110, %90 : vector<8x32xf32>
    %114 = arith.mulf %109, %111 : vector<8x32xf32>
    %115 = arith.addf %113, %114 : vector<8x32xf32>
    %116 = math.tanh %115 : vector<8x32xf32>
    %117 = arith.mulf %112, %116 : vector<8x32xf32>
    %c24_42 = arith.constant 24 : index
    %c0_43 = arith.constant 0 : index
    %118 = vector.load %arg13[%c24_42, %c0_43] : memref<64x32xf32, #tpu.memory_space<vmem>>, vector<8x32xf32>
    tpu.vector_store %arg13[%c24_42, %c0_43], %117 {strides = array<i32>} : memref<64x32xf32, #tpu.memory_space<vmem>>, vector<8x32xf32>,
    %c32 = arith.constant 32 : index
    %c0_44 = arith.constant 0 : index
    %119 = vector.load %arg12[%c32, %c0_44] : memref<64x128xf32, #tpu.memory_space<vmem>>, vector<8x128xf32>
    %120 = arith.truncf %117 : vector<8x32xf32> to vector<8x32xbf16>
    %cst_45 = arith.constant dense<0.000000e+00> : vector<8x128xf32>
    %121 = tpu.matmul %120, %1, %cst_45 {dimension_numbers = #tpu.dot_dimension_numbers<[1], [0], [0], [1], [0, 0, 1, 1], [], []>} : vector<8x32xbf16>, vector<32x128xbf16>, vector<8x128xf32> -> vector<8x128xf32>
    %122 = arith.addf %119, %121 : vector<8x128xf32>
    %123 = arith.mulf %122, %16 : vector<8x128xf32>
    %124 = arith.negf %123 : vector<8x128xf32>
    %125 = math.exp %124 : vector<8x128xf32>
    %cst_46 = arith.constant 1.000000e+00 : f32
    %126 = vector.broadcast %cst_46 : f32 to vector<8x128xf32>
    %127 = arith.addf %126, %125 : vector<8x128xf32>
    %128 = arith.divf %126, %127 : vector<8x128xf32>
    %cst_47 = arith.constant 2.000000e+00 : f32
    %129 = vector.broadcast %cst_47 : f32 to vector<8x128xf32>
    %130 = arith.mulf %129, %128 : vector<8x128xf32>
    %cst_48 = arith.constant 1.000000e+00 : f32
    %131 = vector.broadcast %cst_48 : f32 to vector<8x128xf32>
    %132 = arith.subf %130, %131 : vector<8x128xf32>
    %133 = arith.select %13, %132, %128 : vector<8x128xi1>, vector<8x128xf32>
    %134 = vector.extract_strided_slice %133 {offsets = [0, 0], sizes = [8, 32], strides = [1, 1]} : vector<8x128xf32> to vector<8x32xf32>
    %135 = vector.extract_strided_slice %133 {offsets = [0, 32], sizes = [8, 32], strides = [1, 1]} : vector<8x128xf32> to vector<8x32xf32>
    %136 = vector.extract_strided_slice %133 {offsets = [0, 64], sizes = [8, 32], strides = [1, 1]} : vector<8x128xf32> to vector<8x32xf32>
    %137 = vector.extract_strided_slice %133 {offsets = [0, 96], sizes = [8, 32], strides = [1, 1]} : vector<8x128xf32> to vector<8x32xf32>
    %138 = arith.mulf %135, %115 : vector<8x32xf32>
    %139 = arith.mulf %134, %136 : vector<8x32xf32>
    %140 = arith.addf %138, %139 : vector<8x32xf32>
    %141 = math.tanh %140 : vector<8x32xf32>
    %142 = arith.mulf %137, %141 : vector<8x32xf32>
    %c32_49 = arith.constant 32 : index
    %c0_50 = arith.constant 0 : index
    %143 = vector.load %arg13[%c32_49, %c0_50] : memref<64x32xf32, #tpu.memory_space<vmem>>, vector<8x32xf32>
    tpu.vector_store %arg13[%c32_49, %c0_50], %142 {strides = array<i32>} : memref<64x32xf32, #tpu.memory_space<vmem>>, vector<8x32xf32>,
    %c40 = arith.constant 40 : index
    %c0_51 = arith.constant 0 : index
    %144 = vector.load %arg12[%c40, %c0_51] : memref<64x128xf32, #tpu.memory_space<vmem>>, vector<8x128xf32>
    %145 = arith.truncf %142 : vector<8x32xf32> to vector<8x32xbf16>
    %cst_52 = arith.constant dense<0.000000e+00> : vector<8x128xf32>
    %146 = tpu.matmul %145, %1, %cst_52 {dimension_numbers = #tpu.dot_dimension_numbers<[1], [0], [0], [1], [0, 0, 1, 1], [], []>} : vector<8x32xbf16>, vector<32x128xbf16>, vector<8x128xf32> -> vector<8x128xf32>
    %147 = arith.addf %144, %146 : vector<8x128xf32>
    %148 = arith.mulf %147, %16 : vector<8x128xf32>
    %149 = arith.negf %148 : vector<8x128xf32>
    %150 = math.exp %149 : vector<8x128xf32>
    %cst_53 = arith.constant 1.000000e+00 : f32
    %151 = vector.broadcast %cst_53 : f32 to vector<8x128xf32>
    %152 = arith.addf %151, %150 : vector<8x128xf32>
    %153 = arith.divf %151, %152 : vector<8x128xf32>
    %cst_54 = arith.constant 2.000000e+00 : f32
    %154 = vector.broadcast %cst_54 : f32 to vector<8x128xf32>
    %155 = arith.mulf %154, %153 : vector<8x128xf32>
    %cst_55 = arith.constant 1.000000e+00 : f32
    %156 = vector.broadcast %cst_55 : f32 to vector<8x128xf32>
    %157 = arith.subf %155, %156 : vector<8x128xf32>
    %158 = arith.select %13, %157, %153 : vector<8x128xi1>, vector<8x128xf32>
    %159 = vector.extract_strided_slice %158 {offsets = [0, 0], sizes = [8, 32], strides = [1, 1]} : vector<8x128xf32> to vector<8x32xf32>
    %160 = vector.extract_strided_slice %158 {offsets = [0, 32], sizes = [8, 32], strides = [1, 1]} : vector<8x128xf32> to vector<8x32xf32>
    %161 = vector.extract_strided_slice %158 {offsets = [0, 64], sizes = [8, 32], strides = [1, 1]} : vector<8x128xf32> to vector<8x32xf32>
    %162 = vector.extract_strided_slice %158 {offsets = [0, 96], sizes = [8, 32], strides = [1, 1]} : vector<8x128xf32> to vector<8x32xf32>
    %163 = arith.mulf %160, %140 : vector<8x32xf32>
    %164 = arith.mulf %159, %161 : vector<8x32xf32>
    %165 = arith.addf %163, %164 : vector<8x32xf32>
    %166 = math.tanh %165 : vector<8x32xf32>
    %167 = arith.mulf %162, %166 : vector<8x32xf32>
    %c40_56 = arith.constant 40 : index
    %c0_57 = arith.constant 0 : index
    %168 = vector.load %arg13[%c40_56, %c0_57] : memref<64x32xf32, #tpu.memory_space<vmem>>, vector<8x32xf32>
    tpu.vector_store %arg13[%c40_56, %c0_57], %167 {strides = array<i32>} : memref<64x32xf32, #tpu.memory_space<vmem>>, vector<8x32xf32>,
    %c48 = arith.constant 48 : index
    %c0_58 = arith.constant 0 : index
    %169 = vector.load %arg12[%c48, %c0_58] : memref<64x128xf32, #tpu.memory_space<vmem>>, vector<8x128xf32>
    %170 = arith.truncf %167 : vector<8x32xf32> to vector<8x32xbf16>
    %cst_59 = arith.constant dense<0.000000e+00> : vector<8x128xf32>
    %171 = tpu.matmul %170, %1, %cst_59 {dimension_numbers = #tpu.dot_dimension_numbers<[1], [0], [0], [1], [0, 0, 1, 1], [], []>} : vector<8x32xbf16>, vector<32x128xbf16>, vector<8x128xf32> -> vector<8x128xf32>
    %172 = arith.addf %169, %171 : vector<8x128xf32>
    %173 = arith.mulf %172, %16 : vector<8x128xf32>
    %174 = arith.negf %173 : vector<8x128xf32>
    %175 = math.exp %174 : vector<8x128xf32>
    %cst_60 = arith.constant 1.000000e+00 : f32
    %176 = vector.broadcast %cst_60 : f32 to vector<8x128xf32>
    %177 = arith.addf %176, %175 : vector<8x128xf32>
    %178 = arith.divf %176, %177 : vector<8x128xf32>
    %cst_61 = arith.constant 2.000000e+00 : f32
    %179 = vector.broadcast %cst_61 : f32 to vector<8x128xf32>
    %180 = arith.mulf %179, %178 : vector<8x128xf32>
    %cst_62 = arith.constant 1.000000e+00 : f32
    %181 = vector.broadcast %cst_62 : f32 to vector<8x128xf32>
    %182 = arith.subf %180, %181 : vector<8x128xf32>
    %183 = arith.select %13, %182, %178 : vector<8x128xi1>, vector<8x128xf32>
    %184 = vector.extract_strided_slice %183 {offsets = [0, 0], sizes = [8, 32], strides = [1, 1]} : vector<8x128xf32> to vector<8x32xf32>
    %185 = vector.extract_strided_slice %183 {offsets = [0, 32], sizes = [8, 32], strides = [1, 1]} : vector<8x128xf32> to vector<8x32xf32>
    %186 = vector.extract_strided_slice %183 {offsets = [0, 64], sizes = [8, 32], strides = [1, 1]} : vector<8x128xf32> to vector<8x32xf32>
    %187 = vector.extract_strided_slice %183 {offsets = [0, 96], sizes = [8, 32], strides = [1, 1]} : vector<8x128xf32> to vector<8x32xf32>
    %188 = arith.mulf %185, %165 : vector<8x32xf32>
    %189 = arith.mulf %184, %186 : vector<8x32xf32>
    %190 = arith.addf %188, %189 : vector<8x32xf32>
    %191 = math.tanh %190 : vector<8x32xf32>
    %192 = arith.mulf %187, %191 : vector<8x32xf32>
    %c48_63 = arith.constant 48 : index
    %c0_64 = arith.constant 0 : index
    %193 = vector.load %arg13[%c48_63, %c0_64] : memref<64x32xf32, #tpu.memory_space<vmem>>, vector<8x32xf32>
    tpu.vector_store %arg13[%c48_63, %c0_64], %192 {strides = array<i32>} : memref<64x32xf32, #tpu.memory_space<vmem>>, vector<8x32xf32>,
    %c56 = arith.constant 56 : index
    %c0_65 = arith.constant 0 : index
    %194 = vector.load %arg12[%c56, %c0_65] : memref<64x128xf32, #tpu.memory_space<vmem>>, vector<8x128xf32>
    %195 = arith.truncf %192 : vector<8x32xf32> to vector<8x32xbf16>
    %cst_66 = arith.constant dense<0.000000e+00> : vector<8x128xf32>
    %196 = tpu.matmul %195, %1, %cst_66 {dimension_numbers = #tpu.dot_dimension_numbers<[1], [0], [0], [1], [0, 0, 1, 1], [], []>} : vector<8x32xbf16>, vector<32x128xbf16>, vector<8x128xf32> -> vector<8x128xf32>
    %197 = arith.addf %194, %196 : vector<8x128xf32>
    %198 = arith.mulf %197, %16 : vector<8x128xf32>
    %199 = arith.negf %198 : vector<8x128xf32>
    %200 = math.exp %199 : vector<8x128xf32>
    %cst_67 = arith.constant 1.000000e+00 : f32
    %201 = vector.broadcast %cst_67 : f32 to vector<8x128xf32>
    %202 = arith.addf %201, %200 : vector<8x128xf32>
    %203 = arith.divf %201, %202 : vector<8x128xf32>
    %cst_68 = arith.constant 2.000000e+00 : f32
    %204 = vector.broadcast %cst_68 : f32 to vector<8x128xf32>
    %205 = arith.mulf %204, %203 : vector<8x128xf32>
    %cst_69 = arith.constant 1.000000e+00 : f32
    %206 = vector.broadcast %cst_69 : f32 to vector<8x128xf32>
    %207 = arith.subf %205, %206 : vector<8x128xf32>
    %208 = arith.select %13, %207, %203 : vector<8x128xi1>, vector<8x128xf32>
    %209 = vector.extract_strided_slice %208 {offsets = [0, 0], sizes = [8, 32], strides = [1, 1]} : vector<8x128xf32> to vector<8x32xf32>
    %210 = vector.extract_strided_slice %208 {offsets = [0, 32], sizes = [8, 32], strides = [1, 1]} : vector<8x128xf32> to vector<8x32xf32>
    %211 = vector.extract_strided_slice %208 {offsets = [0, 64], sizes = [8, 32], strides = [1, 1]} : vector<8x128xf32> to vector<8x32xf32>
    %212 = vector.extract_strided_slice %208 {offsets = [0, 96], sizes = [8, 32], strides = [1, 1]} : vector<8x128xf32> to vector<8x32xf32>
    %213 = arith.mulf %210, %190 : vector<8x32xf32>
    %214 = arith.mulf %209, %211 : vector<8x32xf32>
    %215 = arith.addf %213, %214 : vector<8x32xf32>
    %216 = math.tanh %215 : vector<8x32xf32>
    %217 = arith.mulf %212, %216 : vector<8x32xf32>
    %c56_70 = arith.constant 56 : index
    %c0_71 = arith.constant 0 : index
    %218 = vector.load %arg13[%c56_70, %c0_71] : memref<64x32xf32, #tpu.memory_space<vmem>>, vector<8x32xf32>
    tpu.vector_store %arg13[%c56_70, %c0_71], %217 {strides = array<i32>} : memref<64x32xf32, #tpu.memory_space<vmem>>, vector<8x32xf32>,
    %c0_72 = arith.constant 0 : index
    %c0_73 = arith.constant 0 : index
    %219 = vector.load %arg10[%c0_72, %c0_73] : memref<8x32xf32, #tpu.memory_space<vmem>>, vector<8x32xf32>
    tpu.vector_store %arg10[%c0_72, %c0_73], %217 {strides = array<i32>} : memref<8x32xf32, #tpu.memory_space<vmem>>, vector<8x32xf32>,
    %c0_74 = arith.constant 0 : index
    %c0_75 = arith.constant 0 : index
    %220 = vector.load %arg11[%c0_74, %c0_75] : memref<8x32xf32, #tpu.memory_space<vmem>>, vector<8x32xf32>
    tpu.vector_store %arg11[%c0_74, %c0_75], %215 {strides = array<i32>} : memref<8x32xf32, #tpu.memory_space<vmem>>, vector<8x32xf32>,
    %c0_76 = arith.constant 0 : index
    %c0_77 = arith.constant 0 : index
    %221 = vector.load %arg13[%c0_76, %c0_77] : memref<64x32xf32, #tpu.memory_space<vmem>>, vector<64x32xf32>
    %222 = arith.truncf %221 : vector<64x32xf32> to vector<64x32xbf16>
    %c0_78 = arith.constant 0 : index
    %c0_79 = arith.constant 0 : index
    %223 = vector.load %arg7[%c0_78, %c0_79] : memref<32x128xbf16, #tpu.memory_space<vmem>>, vector<32x128xbf16>
    %cst_80 = arith.constant dense<0.000000e+00> : vector<64x128xf32>
    %224 = tpu.matmul %222, %223, %cst_80 {dimension_numbers = #tpu.dot_dimension_numbers<[1], [0], [0], [1], [0, 0, 1, 1], [], []>} : vector<64x32xbf16>, vector<32x128xbf16>, vector<64x128xf32> -> vector<64x128xf32>
    %c0_81 = arith.constant 0 : index
    %c0_82 = arith.constant 0 : index
    %225 = vector.load %arg8[%c0_81, %c0_82] : memref<1x128xf32, #tpu.memory_space<vmem>>, vector<1x128xf32>
    %226 = vector.broadcast %225 : vector<1x128xf32> to vector<64x128xf32>
    %227 = arith.addf %224, %226 : vector<64x128xf32>
    %cst_83 = arith.constant dense<0xFF800000> : vector<64xf32>
    %228 = vector.multi_reduction <maximumf>, %227, %cst_83 [1] : vector<64x128xf32> to vector<64xf32>
    %229 = vector.shape_cast %228 : vector<64xf32> to vector<64x1xf32>
    %230 = vector.broadcast %229 : vector<64x1xf32> to vector<64x128xf32>
    %231 = arith.subf %227, %230 : vector<64x128xf32>
    %232 = math.exp %231 : vector<64x128xf32>
    %cst_84 = arith.constant dense<0.000000e+00> : vector<64xf32>
    %233 = vector.multi_reduction <add>, %232, %cst_84 [1] : vector<64x128xf32> to vector<64xf32>
    %234 = vector.shape_cast %233 : vector<64xf32> to vector<64x1xf32>
    %235 = math.log %234 : vector<64x1xf32>
    %236 = vector.broadcast %235 : vector<64x1xf32> to vector<64x128xf32>
    %237 = arith.subf %231, %236 : vector<64x128xf32>
    %c0_85 = arith.constant 0 : index
    %c0_86 = arith.constant 0 : index
    %238 = vector.load %arg9[%c0_85, %c0_86] : memref<64x128xf32, #tpu.memory_space<vmem>>, vector<64x128xf32>
    tpu.vector_store %arg9[%c0_85, %c0_86], %237 {strides = array<i32>} : memref<64x128xf32, #tpu.memory_space<vmem>>, vector<64x128xf32>,
    return
  }
  func.func @transform_0(%arg0: i32) -> (i32, i32) {
    %c0_i32 = arith.constant 0 : i32
    %c0_i32_0 = arith.constant 0 : i32
    %c0_i32_1 = arith.constant 0 : i32
    return %c0_i32, %c0_i32_0 : i32, i32
  }
  func.func @transform_1(%arg0: i32) -> (i32, i32) {
    %c0_i32 = arith.constant 0 : i32
    %c0_i32_0 = arith.constant 0 : i32
    %c0_i32_1 = arith.constant 0 : i32
    return %c0_i32, %c0_i32_0 : i32, i32
  }
  func.func @transform_2(%arg0: i32) -> (i32, i32) {
    %c0_i32 = arith.constant 0 : i32
    %c0_i32_0 = arith.constant 0 : i32
    %c0_i32_1 = arith.constant 0 : i32
    return %c0_i32, %c0_i32_0 : i32, i32
  }
  func.func @transform_3(%arg0: i32) -> (i32, i32) {
    %c0_i32 = arith.constant 0 : i32
    %c0_i32_0 = arith.constant 0 : i32
    %c0_i32_1 = arith.constant 0 : i32
    return %c0_i32, %c0_i32_0 : i32, i32
  }
  func.func @transform_4(%arg0: i32) -> (i32, i32) {
    %c0_i32 = arith.constant 0 : i32
    %c0_i32_0 = arith.constant 0 : i32
    %c0_i32_1 = arith.constant 0 : i32
    return %c0_i32, %c0_i32_0 : i32, i32
  }
  func.func @transform_5(%arg0: i32) -> (i32, i32) {
    %c0_i32 = arith.constant 0 : i32
    %c0_i32_0 = arith.constant 0 : i32
    %c0_i32_1 = arith.constant 0 : i32
    return %c0_i32, %c0_i32_0 : i32, i32
  }
  func.func @transform_6(%arg0: i32) -> (i32, i32) {
    %c0_i32 = arith.constant 0 : i32
    %c0_i32_0 = arith.constant 0 : i32
    %c0_i32_1 = arith.constant 0 : i32
    return %c0_i32, %c0_i32_0 : i32, i32
  }
  func.func @transform_7(%arg0: i32) -> (i32, i32) {
    %c0_i32 = arith.constant 0 : i32
    %c0_i32_0 = arith.constant 0 : i32
    %c0_i32_1 = arith.constant 0 : i32
    return %c0_i32, %c0_i32_0 : i32, i32
  }
  func.func @transform_8(%arg0: i32) -> (i32, i32) {
    %c0_i32 = arith.constant 0 : i32
    %c0_i32_0 = arith.constant 0 : i32
    %c0_i32_1 = arith.constant 0 : i32
    return %c0_i32, %c0_i32_0 : i32, i32
  }
  func.func @transform_9(%arg0: i32) -> (i32, i32) {
    %c0_i32 = arith.constant 0 : i32
    %c0_i32_0 = arith.constant 0 : i32
    %c0_i32_1 = arith.constant 0 : i32
    return %c0_i32, %c0_i32_0 : i32, i32
  }
  func.func @transform_10(%arg0: i32) -> (i32, i32) {
    %c0_i32 = arith.constant 0 : i32
    %c0_i32_0 = arith.constant 0 : i32
    %c0_i32_1 = arith.constant 0 : i32
    return %c0_i32, %c0_i32_0 : i32, i32
  }
}

</mosaic_0001>

<llo_original>
// kernel: lstm_network_forward.1
$region0: #{lstm_network_forward.1}
  #allocation0 [shape = 'u32[]', space=smem, size = 0x4, offset = 0x4, fixed_abs, tag = 'smem constant byte address 0x4 - core index']
  #allocation1 [shape = 'u32[144,128]{1,0:T(1,128)}', space=vmem, size = 0x12000, scoped, tag = 'internal scratch']
  #allocation2 [shape = 'f32[64,128]{1,0:T(8,128)}', space=vmem, size = 0x8000, scoped, tag = 'scratch operand']
  #allocation3 [shape = 'f32[64,32]{1,0:T(8,128)}', space=vmem, size = 0x8000, scoped, tag = 'scratch operand']
  %s0 = inlined_call_operand.vmem [shape: bf16[64,32], index: 0, kind: input, shape index: {}]
  %s1 = inlined_call_operand.vmem [shape: f32[8,32], index: 1, kind: input, shape index: {}, may-alias: {1,9}]
  %s2 = inlined_call_operand.vmem [shape: f32[8,32], index: 2, kind: input, shape index: {}, may-alias: {2,10}]
  %s3 = inlined_call_operand.vmem [shape: bf16[32,128], index: 3, kind: input, shape index: {}]
  %s4 = inlined_call_operand.vmem [shape: bf16[32,128], index: 4, kind: input, shape index: {}]
  %s5 = inlined_call_operand.vmem [shape: f32[1,128], index: 5, kind: input, shape index: {}]
  %s6 = inlined_call_operand.vmem [shape: bf16[32,128], index: 6, kind: input, shape index: {}]
  %s7 = inlined_call_operand.vmem [shape: f32[1,128], index: 7, kind: input, shape index: {}]
  %s8 = inlined_call_operand.vmem [shape: f32[64,128], index: 8, kind: output, shape index: {0}]
  %s9 = inlined_call_operand.vmem [shape: f32[8,32], index: 9, kind: output, shape index: {1}, may-alias: {1,9}]
  %s10 = inlined_call_operand.vmem [shape: f32[8,32], index: 10, kind: output, shape index: {2}, may-alias: {2,10}]
  %11 = xla_tuple %s8, %s9, %s10
  %s12 = sld [smem:[#allocation0]]
  $region58: #{lstm_network_forward.1} parent=0
    _
  %s14 = ssub.s32 1, %s12
  %s15 = scalar_select 0, %s14, %s12
  // Predicated region
  $region2: #{lstm_network_forward.1} parent=0 // pred_check
    _
  $region3: #{lstm_network_forward.1} parent=0 // pred_check_branch
    %17 = sbr.rel (0) target = $region5
  $region4: #{lstm_network_forward.1} parent=0 // pred_region
    _
  $region5: #{lstm_network_forward.1} parent=0 // pred_fallthru
    _
  // Predicated region
  $region6: #{lstm_network_forward.1} parent=0 // pred_check
    _
  $region7: #{lstm_network_forward.1} parent=0 // pred_check_branch
    %19 = sbr.rel (0) target = $region9
  $region8: #{lstm_network_forward.1} parent=0 // pred_region
    _
  $region9: #{lstm_network_forward.1} parent=0 // pred_fallthru
    _
  // Predicated region
  $region10: #{lstm_network_forward.1} parent=0 // pred_check
    _
  $region11: #{lstm_network_forward.1} parent=0 // pred_check_branch
    %21 = sbr.rel (0) target = $region13
  $region12: #{lstm_network_forward.1} parent=0 // pred_region
    _
  $region13: #{lstm_network_forward.1} parent=0 // pred_fallthru
    _
  // Predicated region
  $region14: #{lstm_network_forward.1} parent=0 // pred_check
    _
  $region15: #{lstm_network_forward.1} parent=0 // pred_check_branch
    %23 = sbr.rel (0) target = $region17
  $region16: #{lstm_network_forward.1} parent=0 // pred_region
    _
  $region17: #{lstm_network_forward.1} parent=0 // pred_fallthru
    _
  // Predicated region
  $region18: #{lstm_network_forward.1} parent=0 // pred_check
    _
  $region19: #{lstm_network_forward.1} parent=0 // pred_check_branch
    %25 = sbr.rel (0) target = $region21
  $region20: #{lstm_network_forward.1} parent=0 // pred_region
    _
  $region21: #{lstm_network_forward.1} parent=0 // pred_fallthru
    _
  // Predicated region
  $region22: #{lstm_network_forward.1} parent=0 // pred_check
    _
  $region23: #{lstm_network_forward.1} parent=0 // pred_check_branch
    %27 = sbr.rel (0) target = $region25
  $region24: #{lstm_network_forward.1} parent=0 // pred_region
    _
  $region25: #{lstm_network_forward.1} parent=0 // pred_fallthru
    _
  // Predicated region
  $region26: #{lstm_network_forward.1} parent=0 // pred_check
    _
  $region27: #{lstm_network_forward.1} parent=0 // pred_check_branch
    %29 = sbr.rel (0) target = $region29
  $region28: #{lstm_network_forward.1} parent=0 // pred_region
    _
  $region29: #{lstm_network_forward.1} parent=0 // pred_fallthru
    _
  // Predicated region
  $region30: #{lstm_network_forward.1} parent=0 // pred_check
    _
  $region31: #{lstm_network_forward.1} parent=0 // pred_check_branch
    %31 = sbr.rel (0) target = $region33
  $region32: #{lstm_network_forward.1} parent=0 // pred_region
    _
  $region33: #{lstm_network_forward.1} parent=0 // pred_fallthru
    _
  %v33 = vld [vmem:[%s5] sm:$0x1]
  %v34 = vld [vmem:[%s4] sm:$0xf]
  %v35 = vld [vmem:[%s4 + $0x4] sm:$0xf]
  %v36 = vld [vmem:[%s4 + $0x8] sm:$0xf]
  %v37 = vld [vmem:[%s4 + $0xc] sm:$0xf]
  %v38 = vld [vmem:[%s0] sm:$0xf]
  %v39 = vld [vmem:[%s0 + $0x4] sm:$0xf]
  %v40 = vld [vmem:[%s0 + $0x8] sm:$0xf]
  %v41 = vld [vmem:[%s0 + $0xc] sm:$0xf]
  %v42 = vld [vmem:[%s0 + $0x10] sm:$0xf]
  %v43 = vld [vmem:[%s0 + $0x14] sm:$0xf]
  %v44 = vld [vmem:[%s0 + $0x18] sm:$0xf]
  %v45 = vld [vmem:[%s0 + $0x1c] sm:$0xf]
  %v46 = vld [vmem:[%s3] sm:$0xf]
  %v47 = vld [vmem:[%s3 + $0x4] sm:$0xf]
  %v48 = vld [vmem:[%s3 + $0x8] sm:$0xf]
  %v49 = vld [vmem:[%s3 + $0xc] sm:$0xf]
  %v51 = vlaneseq
  %v52 = vshrl.u32 %v51, 7
  %v53 = vsub.s32 0, %v52
  %v54 = vrot.slane %v33, %v53
  %v64 = vunpack.c.l.b16 %v38
  %v65 = vunpack.c.l.b16 %v39
  %v66 = vunpack.c.l.b16 %v40
  %v67 = vunpack.c.l.b16 %v41
  %v68 = vunpack.c.l.b16 %v42
  %v69 = vunpack.c.l.b16 %v43
  %v70 = vunpack.c.l.b16 %v44
  %v71 = vunpack.c.l.b16 %v45
  %v72 = vpack.c.b16 %v65, %v64
  %v73 = vpack.c.b16 %v67, %v66
  %v74 = vpack.c.b16 %v69, %v68
  %v75 = vpack.c.b16 %v71, %v70
  %v80 = vunpack.c.l.b16 %v46
  %v81 = vunpack.c.l.b16 %v47
  %v82 = vunpack.c.l.b16 %v48
  %v83 = vunpack.c.l.b16 %v49
  %v84 = vpack.c.b16 %v81, %v80
  %v85 = vpack.c.b16 %v83, %v82
  %vm88 = vcmask 261120
  %v90 = vsel %vm88, %v72, 0
  %v93 = vsel %vm88, %v73, 0
  %v96 = vsel %vm88, %v74, 0
  %v99 = vsel %vm88, %v75, 0
  %101 = vmatprep.subr.bf16.mxu0 0
  %102 = vmatpush1.bf16.msra.mxu0 %v84
  %103 = vmatprep.subr.bf16.mxu0 0
  %104 = vmatpush1.bf16.msra.mxu0 %v85
  %105 = vmatprep.subr.bf16.mxu0 0
  %106 = vmatpush1.bf16.msra.mxu0 0
  %107 = vmatprep.subr.bf16.mxu0 0
  %108 = vmatpush1.bf16.msra.mxu0 0
  %109 = vmatprep.subr.bf16.mxu0 0
  %110 = vmatpush1.bf16.msra.mxu0 0
  %111 = vmatprep.subr.bf16.mxu0 0
  %112 = vmatpush1.bf16.msra.mxu0 0
  %113 = vmatprep.subr.bf16.mxu0 0
  %114 = vmatpush1.bf16.msra.mxu0 0
  %115 = vmatprep.subr.bf16.mxu0 0
  %116 = vmatpush1.bf16.msra.mxu0 0
  %117 = vmatprep.subr.bf16.mxu0 0
  %118 = vmatpush1.bf16.msra.mxu0 0
  %119 = vmatprep.subr.bf16.mxu0 0
  %120 = vmatpush1.bf16.msra.mxu0 0
  %121 = vmatprep.subr.bf16.mxu0 0
  %122 = vmatpush1.bf16.msra.mxu0 0
  %123 = vmatprep.subr.bf16.mxu0 0
  %124 = vmatpush1.bf16.msra.mxu0 0
  %125 = vmatprep.subr.bf16.mxu0 0
  %126 = vmatpush1.bf16.msra.mxu0 0
  %127 = vmatprep.subr.bf16.mxu0 0
  %128 = vmatpush1.bf16.msra.mxu0 0
  %129 = vmatprep.subr.bf16.mxu0 0
  %130 = vmatpush1.bf16.msra.mxu0 0
  %131 = vmatprep.subr.bf16.mxu0 0
  %132 = vmatpush1.bf16.msra.mxu0 0
  %133 = vmatprep.mubr.bf16.mxu0 0
  %134 = vmatmul.mubr.bf16.gmra.mrb[0].mxu0 %v90
  %v135 = vpop.f32.mrb[0].mxu0
  %v136 = vadd.f32 %v54, %v135
  %v137 = vpop.f32.mrb[0].mxu0
  %v138 = vpop.f32.mrb[0].mxu0
  %v139 = vadd.f32 %v54, %v138
  %v140 = vpop.f32.mrb[0].mxu0
  %141 = vmatprep.mubr.bf16.mxu0 0
  %142 = vmatmul.mubr.bf16.gmra.mrb[0].mxu0 %v93
  %v143 = vpop.f32.mrb[0].mxu0
  %v144 = vadd.f32 %v54, %v143
  %v145 = vpop.f32.mrb[0].mxu0
  %v146 = vpop.f32.mrb[0].mxu0
  %v147 = vadd.f32 %v54, %v146
  %v148 = vpop.f32.mrb[0].mxu0
  %149 = vmatprep.mubr.bf16.mxu0 0
  %150 = vmatmul.mubr.bf16.gmra.mrb[0].mxu0 %v96
  %v151 = vpop.f32.mrb[0].mxu0
  %v152 = vadd.f32 %v54, %v151
  %v153 = vpop.f32.mrb[0].mxu0
  %v154 = vpop.f32.mrb[0].mxu0
  %v155 = vadd.f32 %v54, %v154
  %v156 = vpop.f32.mrb[0].mxu0
  %157 = vmatprep.mubr.bf16.mxu0 0
  %158 = vmatmul.mubr.bf16.gmra.mrb[0].mxu0 %v99
  %v159 = vpop.f32.mrb[0].mxu0
  %v160 = vadd.f32 %v54, %v159
  %v161 = vpop.f32.mrb[0].mxu0
  %v162 = vpop.f32.mrb[0].mxu0
  %v163 = vadd.f32 %v54, %v162
  %v164 = vpop.f32.mrb[0].mxu0
  %165 = vdwg.mxu0
  %166 = vst [vmem:[#allocation2] sm:$0xff] %v136
  %167 = vst [vmem:[#allocation2 + $0x8] sm:$0xff] %v139
  %168 = vst [vmem:[#allocation2 + $0x10] sm:$0xff] %v144
  %169 = vst [vmem:[#allocation2 + $0x18] sm:$0xff] %v147
  %170 = vst [vmem:[#allocation2 + $0x20] sm:$0xff] %v152
  %171 = vst [vmem:[#allocation2 + $0x28] sm:$0xff] %v155
  %172 = vst [vmem:[#allocation2 + $0x30] sm:$0xff] %v160
  %173 = vst [vmem:[#allocation2 + $0x38] sm:$0xff] %v163
  %v174 = vlaneseq
  %v175 = vand.u32 %v174, 127
  %vm176 = vcmp.ge.s32.totalorder %v175, 64
  %vm177 = vcmp.lt.s32.totalorder %v175, 96
  %vm178 = vmand %vm176, %vm177
  %v179 = vsel %vm178, 2.0, 1.0
  %v180 = vld [vmem:[%s1] sm:$0xff]
  %v181 = vld [vmem:[%s2] sm:$0xff]
  %v182 = vld [vmem:[#allocation2] sm:$0xff]
  %v183 = vpack.c.bf16 %v180, %v180
  %v188 = vunpack.c.l.b16 %v34
  %v189 = vunpack.c.l.b16 %v35
  %v190 = vunpack.c.l.b16 %v36
  %v191 = vunpack.c.l.b16 %v37
  %v192 = vpack.c.b16 %v189, %v188
  %v193 = vpack.c.b16 %v191, %v190
  %v197 = vsel %vm88, %v183, 0
  %199 = vmatprep.subr.bf16.mxu0 0
  %200 = vmatpush1.bf16.msra.mxu0 %v192
  %201 = vmatprep.subr.bf16.mxu0 0
  %202 = vmatpush1.bf16.msra.mxu0 %v193
  %203 = vmatprep.subr.bf16.mxu0 0
  %204 = vmatpush1.bf16.msra.mxu0 0
  %205 = vmatprep.subr.bf16.mxu0 0
  %206 = vmatpush1.bf16.msra.mxu0 0
  %207 = vmatprep.subr.bf16.mxu0 0
  %208 = vmatpush1.bf16.msra.mxu0 0
  %209 = vmatprep.subr.bf16.mxu0 0
  %210 = vmatpush1.bf16.msra.mxu0 0
  %211 = vmatprep.subr.bf16.mxu0 0
  %212 = vmatpush1.bf16.msra.mxu0 0
  %213 = vmatprep.subr.bf16.mxu0 0
  %214 = vmatpush1.bf16.msra.mxu0 0
  %215 = vmatprep.subr.bf16.mxu0 0
  %216 = vmatpush1.bf16.msra.mxu0 0
  %217 = vmatprep.subr.bf16.mxu0 0
  %218 = vmatpush1.bf16.msra.mxu0 0
  %219 = vmatprep.subr.bf16.mxu0 0
  %220 = vmatpush1.bf16.msra.mxu0 0
  %221 = vmatprep.subr.bf16.mxu0 0
  %222 = vmatpush1.bf16.msra.mxu0 0
  %223 = vmatprep.subr.bf16.mxu0 0
  %224 = vmatpush1.bf16.msra.mxu0 0
  %225 = vmatprep.subr.bf16.mxu0 0
  %226 = vmatpush1.bf16.msra.mxu0 0
  %227 = vmatprep.subr.bf16.mxu0 0
  %228 = vmatpush1.bf16.msra.mxu0 0
  %229 = vmatprep.subr.bf16.mxu0 0
  %230 = vmatpush1.bf16.msra.mxu0 0
  %231 = vmatprep.mubr.bf16.mxu0 0
  %232 = vmatmul.mubr.bf16.gmra.mrb[0].mxu0 %v197
  %v233 = vpop.f32.mrb[0].mxu0
  %v234 = vadd.f32 0.0, %v233
  %v235 = vpop.f32.mrb[0].mxu0
  %v236 = vpop.f32.mrb[0].mxu0
  %v237 = vpop.f32.mrb[0].mxu0
  %238 = vdwg.mxu0
  %v239 = vadd.f32 %v182, %v234
  %v240 = vmul.f32 %v239, %v179
  %v241 = vxor.u32 %v240, 2147483648
  %v242 = vmul.f32 %v241, 1.442695
  %v243 = vpow.pop %v242
  %v244 = vadd.f32 %v243, 1.0
  %v245 = vrcp.pop %v244
  %v246 = vmul.f32 1.0, %v245
  %v247 = vmul.f32 %v246, 2.0
  %v248 = vsub.f32 %v247, 1.0
  %v249 = vsel %vm178, %v248, %v246
  %251 = vrot.lane.b32.xlu0 %v181, 32
  %v252 = vpop.permute.xlu0 %251
  %v254 = vmul.f32 %v249, %v252
  %256 = vrot.lane.b32.xlu0 %v249, 64
  %v257 = vpop.permute.xlu0 %256
  %v259 = vmul.f32 %v249, %v257
  %261 = vrot.lane.b32.xlu0 %v259, 32
  %v262 = vpop.permute.xlu0 %261
  %v264 = vadd.f32 %v254, %v262
  %v265 = vtanh.pop %v264
  %267 = vrot.lane.b32.xlu0 %v265, 64
  %v268 = vpop.permute.xlu0 %267
  %v270 = vmul.f32 %v249, %v268
  %272 = vrot.lane.b32.xlu0 %v270, 32
  %v273 = vpop.permute.xlu0 %272
  %275 = vst.msk [vmem:[#allocation3] sm:$0xff] %vm88, %v273
  %v276 = vld [vmem:[#allocation2 + $0x8] sm:$0xff]
  %v277 = vpack.c.bf16 %v270, %v270
  %279 = vrot.lane.b32.xlu0 %v277, 32
  %v280 = vpop.permute.xlu0 %279
  %v282 = vsel %vm88, %v280, 0
  %284 = vmatprep.subr.bf16.mxu0 0
  %285 = vmatpush1.bf16.msra.mxu0 %v192
  %286 = vmatprep.subr.bf16.mxu0 0
  %287 = vmatpush1.bf16.msra.mxu0 %v193
  %288 = vmatprep.subr.bf16.mxu0 0
  %289 = vmatpush1.bf16.msra.mxu0 0
  %290 = vmatprep.subr.bf16.mxu0 0
  %291 = vmatpush1.bf16.msra.mxu0 0
  %292 = vmatprep.subr.bf16.mxu0 0
  %293 = vmatpush1.bf16.msra.mxu0 0
  %294 = vmatprep.subr.bf16.mxu0 0
  %295 = vmatpush1.bf16.msra.mxu0 0
  %296 = vmatprep.subr.bf16.mxu0 0
  %297 = vmatpush1.bf16.msra.mxu0 0
  %298 = vmatprep.subr.bf16.mxu0 0
  %299 = vmatpush1.bf16.msra.mxu0 0
  %300 = vmatprep.subr.bf16.mxu0 0
  %301 = vmatpush1.bf16.msra.mxu0 0
  %302 = vmatprep.subr.bf16.mxu0 0
  %303 = vmatpush1.bf16.msra.mxu0 0
  %304 = vmatprep.subr.bf16.mxu0 0
  %305 = vmatpush1.bf16.msra.mxu0 0
  %306 = vmatprep.subr.bf16.mxu0 0
  %307 = vmatpush1.bf16.msra.mxu0 0
  %308 = vmatprep.subr.bf16.mxu0 0
  %309 = vmatpush1.bf16.msra.mxu0 0
  %310 = vmatprep.subr.bf16.mxu0 0
  %311 = vmatpush1.bf16.msra.mxu0 0
  %312 = vmatprep.subr.bf16.mxu0 0
  %313 = vmatpush1.bf16.msra.mxu0 0
  %314 = vmatprep.subr.bf16.mxu0 0
  %315 = vmatpush1.bf16.msra.mxu0 0
  %316 = vmatprep.mubr.bf16.mxu0 0
  %317 = vmatmul.mubr.bf16.gmra.mrb[0].mxu0 %v282
  %v318 = vpop.f32.mrb[0].mxu0
  %v319 = vadd.f32 0.0, %v318
  %v320 = vpop.f32.mrb[0].mxu0
  %v321 = vpop.f32.mrb[0].mxu0
  %v322 = vpop.f32.mrb[0].mxu0
  %323 = vdwg.mxu0
  %v324 = vadd.f32 %v276, %v319
  %v325 = vmul.f32 %v324, %v179
  %v326 = vxor.u32 %v325, 2147483648
  %v327 = vmul.f32 %v326, 1.442695
  %v328 = vpow.pop %v327
  %v329 = vadd.f32 %v328, 1.0
  %v330 = vrcp.pop %v329
  %v331 = vmul.f32 1.0, %v330
  %v332 = vmul.f32 %v331, 2.0
  %v333 = vsub.f32 %v332, 1.0
  %v334 = vsel %vm178, %v333, %v331
  %v335 = vmul.f32 %v334, %v264
  %337 = vrot.lane.b32.xlu0 %v334, 64
  %v338 = vpop.permute.xlu0 %337
  %v340 = vmul.f32 %v334, %v338
  %342 = vrot.lane.b32.xlu0 %v340, 32
  %v343 = vpop.permute.xlu0 %342
  %v345 = vadd.f32 %v335, %v343
  %v346 = vtanh.pop %v345
  %348 = vrot.lane.b32.xlu0 %v346, 64
  %v349 = vpop.permute.xlu0 %348
  %v351 = vmul.f32 %v334, %v349
  %353 = vrot.lane.b32.xlu0 %v351, 32
  %v354 = vpop.permute.xlu0 %353
  %356 = vst.msk [vmem:[#allocation3 + $0x8] sm:$0xff] %vm88, %v354
  %v357 = vld [vmem:[#allocation2 + $0x10] sm:$0xff]
  %v358 = vpack.c.bf16 %v351, %v351
  %360 = vrot.lane.b32.xlu0 %v358, 32
  %v361 = vpop.permute.xlu0 %360
  %v363 = vsel %vm88, %v361, 0
  %365 = vmatprep.subr.bf16.mxu0 0
  %366 = vmatpush1.bf16.msra.mxu0 %v192
  %367 = vmatprep.subr.bf16.mxu0 0
  %368 = vmatpush1.bf16.msra.mxu0 %v193
  %369 = vmatprep.subr.bf16.mxu0 0
  %370 = vmatpush1.bf16.msra.mxu0 0
  %371 = vmatprep.subr.bf16.mxu0 0
  %372 = vmatpush1.bf16.msra.mxu0 0
  %373 = vmatprep.subr.bf16.mxu0 0
  %374 = vmatpush1.bf16.msra.mxu0 0
  %375 = vmatprep.subr.bf16.mxu0 0
  %376 = vmatpush1.bf16.msra.mxu0 0
  %377 = vmatprep.subr.bf16.mxu0 0
  %378 = vmatpush1.bf16.msra.mxu0 0
  %379 = vmatprep.subr.bf16.mxu0 0
  %380 = vmatpush1.bf16.msra.mxu0 0
  %381 = vmatprep.subr.bf16.mxu0 0
  %382 = vmatpush1.bf16.msra.mxu0 0
  %383 = vmatprep.subr.bf16.mxu0 0
  %384 = vmatpush1.bf16.msra.mxu0 0
  %385 = vmatprep.subr.bf16.mxu0 0
  %386 = vmatpush1.bf16.msra.mxu0 0
  %387 = vmatprep.subr.bf16.mxu0 0
  %388 = vmatpush1.bf16.msra.mxu0 0
  %389 = vmatprep.subr.bf16.mxu0 0
  %390 = vmatpush1.bf16.msra.mxu0 0
  %391 = vmatprep.subr.bf16.mxu0 0
  %392 = vmatpush1.bf16.msra.mxu0 0
  %393 = vmatprep.subr.bf16.mxu0 0
  %394 = vmatpush1.bf16.msra.mxu0 0
  %395 = vmatprep.subr.bf16.mxu0 0
  %396 = vmatpush1.bf16.msra.mxu0 0
  %397 = vmatprep.mubr.bf16.mxu0 0
  %398 = vmatmul.mubr.bf16.gmra.mrb[0].mxu0 %v363
  %v399 = vpop.f32.mrb[0].mxu0
  %v400 = vadd.f32 0.0, %v399
  %v401 = vpop.f32.mrb[0].mxu0
  %v402 = vpop.f32.mrb[0].mxu0
  %v403 = vpop.f32.mrb[0].mxu0
  %404 = vdwg.mxu0
  %v405 = vadd.f32 %v357, %v400
  %v406 = vmul.f32 %v405, %v179
  %v407 = vxor.u32 %v406, 2147483648
  %v408 = vmul.f32 %v407, 1.442695
  %v409 = vpow.pop %v408
  %v410 = vadd.f32 %v409, 1.0
  %v411 = vrcp.pop %v410
  %v412 = vmul.f32 1.0, %v411
  %v413 = vmul.f32 %v412, 2.0
  %v414 = vsub.f32 %v413, 1.0
  %v415 = vsel %vm178, %v414, %v412
  %v416 = vmul.f32 %v415, %v345
  %418 = vrot.lane.b32.xlu0 %v415, 64
  %v419 = vpop.permute.xlu0 %418
  %v421 = vmul.f32 %v415, %v419
  %423 = vrot.lane.b32.xlu0 %v421, 32
  %v424 = vpop.permute.xlu0 %423
  %v426 = vadd.f32 %v416, %v424
  %v427 = vtanh.pop %v426
  %429 = vrot.lane.b32.xlu0 %v427, 64
  %v430 = vpop.permute.xlu0 %429
  %v432 = vmul.f32 %v415, %v430
  %434 = vrot.lane.b32.xlu0 %v432, 32
  %v435 = vpop.permute.xlu0 %434
  %437 = vst.msk [vmem:[#allocation3 + $0x10] sm:$0xff] %vm88, %v435
  %v438 = vld [vmem:[#allocation2 + $0x18] sm:$0xff]
  %v439 = vpack.c.bf16 %v432, %v432
  %441 = vrot.lane.b32.xlu0 %v439, 32
  %v442 = vpop.permute.xlu0 %441
  %v444 = vsel %vm88, %v442, 0
  %446 = vmatprep.subr.bf16.mxu0 0
  %447 = vmatpush1.bf16.msra.mxu0 %v192
  %448 = vmatprep.subr.bf16.mxu0 0
  %449 = vmatpush1.bf16.msra.mxu0 %v193
  %450 = vmatprep.subr.bf16.mxu0 0
  %451 = vmatpush1.bf16.msra.mxu0 0
  %452 = vmatprep.subr.bf16.mxu0 0
  %453 = vmatpush1.bf16.msra.mxu0 0
  %454 = vmatprep.subr.bf16.mxu0 0
  %455 = vmatpush1.bf16.msra.mxu0 0
  %456 = vmatprep.subr.bf16.mxu0 0
  %457 = vmatpush1.bf16.msra.mxu0 0
  %458 = vmatprep.subr.bf16.mxu0 0
  %459 = vmatpush1.bf16.msra.mxu0 0
  %460 = vmatprep.subr.bf16.mxu0 0
  %461 = vmatpush1.bf16.msra.mxu0 0
  %462 = vmatprep.subr.bf16.mxu0 0
  %463 = vmatpush1.bf16.msra.mxu0 0
  %464 = vmatprep.subr.bf16.mxu0 0
  %465 = vmatpush1.bf16.msra.mxu0 0
  %466 = vmatprep.subr.bf16.mxu0 0
  %467 = vmatpush1.bf16.msra.mxu0 0
  %468 = vmatprep.subr.bf16.mxu0 0
  %469 = vmatpush1.bf16.msra.mxu0 0
  %470 = vmatprep.subr.bf16.mxu0 0
  %471 = vmatpush1.bf16.msra.mxu0 0
  %472 = vmatprep.subr.bf16.mxu0 0
  %473 = vmatpush1.bf16.msra.mxu0 0
  %474 = vmatprep.subr.bf16.mxu0 0
  %475 = vmatpush1.bf16.msra.mxu0 0
  %476 = vmatprep.subr.bf16.mxu0 0
  %477 = vmatpush1.bf16.msra.mxu0 0
  %478 = vmatprep.mubr.bf16.mxu0 0
  %479 = vmatmul.mubr.bf16.gmra.mrb[0].mxu0 %v444
  %v480 = vpop.f32.mrb[0].mxu0
  %v481 = vadd.f32 0.0, %v480
  %v482 = vpop.f32.mrb[0].mxu0
  %v483 = vpop.f32.mrb[0].mxu0
  %v484 = vpop.f32.mrb[0].mxu0
  %485 = vdwg.mxu0
  %v486 = vadd.f32 %v438, %v481
  %v487 = vmul.f32 %v486, %v179
  %v488 = vxor.u32 %v487, 2147483648
  %v489 = vmul.f32 %v488, 1.442695
  %v490 = vpow.pop %v489
  %v491 = vadd.f32 %v490, 1.0
  %v492 = vrcp.pop %v491
  %v493 = vmul.f32 1.0, %v492
  %v494 = vmul.f32 %v493, 2.0
  %v495 = vsub.f32 %v494, 1.0
  %v496 = vsel %vm178, %v495, %v493
  %v497 = vmul.f32 %v496, %v426
  %499 = vrot.lane.b32.xlu0 %v496, 64
  %v500 = vpop.permute.xlu0 %499
  %v502 = vmul.f32 %v496, %v500
  %504 = vrot.lane.b32.xlu0 %v502, 32
  %v505 = vpop.permute.xlu0 %504
  %v507 = vadd.f32 %v497, %v505
  %v508 = vtanh.pop %v507
  %510 = vrot.lane.b32.xlu0 %v508, 64
  %v511 = vpop.permute.xlu0 %510
  %v513 = vmul.f32 %v496, %v511
  %515 = vrot.lane.b32.xlu0 %v513, 32
  %v516 = vpop.permute.xlu0 %515
  %518 = vst.msk [vmem:[#allocation3 + $0x18] sm:$0xff] %vm88, %v516
  %v519 = vld [vmem:[#allocation2 + $0x20] sm:$0xff]
  %v520 = vpack.c.bf16 %v513, %v513
  %522 = vrot.lane.b32.xlu0 %v520, 32
  %v523 = vpop.permute.xlu0 %522
  %v525 = vsel %vm88, %v523, 0
  %527 = vmatprep.subr.bf16.mxu0 0
  %528 = vmatpush1.bf16.msra.mxu0 %v192
  %529 = vmatprep.subr.bf16.mxu0 0
  %530 = vmatpush1.bf16.msra.mxu0 %v193
  %531 = vmatprep.subr.bf16.mxu0 0
  %532 = vmatpush1.bf16.msra.mxu0 0
  %533 = vmatprep.subr.bf16.mxu0 0
  %534 = vmatpush1.bf16.msra.mxu0 0
  %535 = vmatprep.subr.bf16.mxu0 0
  %536 = vmatpush1.bf16.msra.mxu0 0
  %537 = vmatprep.subr.bf16.mxu0 0
  %538 = vmatpush1.bf16.msra.mxu0 0
  %539 = vmatprep.subr.bf16.mxu0 0
  %540 = vmatpush1.bf16.msra.mxu0 0
  %541 = vmatprep.subr.bf16.mxu0 0
  %542 = vmatpush1.bf16.msra.mxu0 0
  %543 = vmatprep.subr.bf16.mxu0 0
  %544 = vmatpush1.bf16.msra.mxu0 0
  %545 = vmatprep.subr.bf16.mxu0 0
  %546 = vmatpush1.bf16.msra.mxu0 0
  %547 = vmatprep.subr.bf16.mxu0 0
  %548 = vmatpush1.bf16.msra.mxu0 0
  %549 = vmatprep.subr.bf16.mxu0 0
  %550 = vmatpush1.bf16.msra.mxu0 0
  %551 = vmatprep.subr.bf16.mxu0 0
  %552 = vmatpush1.bf16.msra.mxu0 0
  %553 = vmatprep.subr.bf16.mxu0 0
  %554 = vmatpush1.bf16.msra.mxu0 0
  %555 = vmatprep.subr.bf16.mxu0 0
  %556 = vmatpush1.bf16.msra.mxu0 0
  %557 = vmatprep.subr.bf16.mxu0 0
  %558 = vmatpush1.bf16.msra.mxu0 0
  %559 = vmatprep.mubr.bf16.mxu0 0
  %560 = vmatmul.mubr.bf16.gmra.mrb[0].mxu0 %v525
  %v561 = vpop.f32.mrb[0].mxu0
  %v562 = vadd.f32 0.0, %v561
  %v563 = vpop.f32.mrb[0].mxu0
  %v564 = vpop.f32.mrb[0].mxu0
  %v565 = vpop.f32.mrb[0].mxu0
  %566 = vdwg.mxu0
  %v567 = vadd.f32 %v519, %v562
  %v568 = vmul.f32 %v567, %v179
  %v569 = vxor.u32 %v568, 2147483648
  %v570 = vmul.f32 %v569, 1.442695
  %v571 = vpow.pop %v570
  %v572 = vadd.f32 %v571, 1.0
  %v573 = vrcp.pop %v572
  %v574 = vmul.f32 1.0, %v573
  %v575 = vmul.f32 %v574, 2.0
  %v576 = vsub.f32 %v575, 1.0
  %v577 = vsel %vm178, %v576, %v574
  %v578 = vmul.f32 %v577, %v507
  %580 = vrot.lane.b32.xlu0 %v577, 64
  %v581 = vpop.permute.xlu0 %580
  %v583 = vmul.f32 %v577, %v581
  %585 = vrot.lane.b32.xlu0 %v583, 32
  %v586 = vpop.permute.xlu0 %585
  %v588 = vadd.f32 %v578, %v586
  %v589 = vtanh.pop %v588
  %591 = vrot.lane.b32.xlu0 %v589, 64
  %v592 = vpop.permute.xlu0 %591
  %v594 = vmul.f32 %v577, %v592
  %596 = vrot.lane.b32.xlu0 %v594, 32
  %v597 = vpop.permute.xlu0 %596
  %599 = vst.msk [vmem:[#allocation3 + $0x20] sm:$0xff] %vm88, %v597
  %v600 = vld [vmem:[#allocation2 + $0x28] sm:$0xff]
  %v601 = vpack.c.bf16 %v594, %v594
  %603 = vrot.lane.b32.xlu0 %v601, 32
  %v604 = vpop.permute.xlu0 %603
  %v606 = vsel %vm88, %v604, 0
  %608 = vmatprep.subr.bf16.mxu0 0
  %609 = vmatpush1.bf16.msra.mxu0 %v192
  %610 = vmatprep.subr.bf16.mxu0 0
  %611 = vmatpush1.bf16.msra.mxu0 %v193
  %612 = vmatprep.subr.bf16.mxu0 0
  %613 = vmatpush1.bf16.msra.mxu0 0
  %614 = vmatprep.subr.bf16.mxu0 0
  %615 = vmatpush1.bf16.msra.mxu0 0
  %616 = vmatprep.subr.bf16.mxu0 0
  %617 = vmatpush1.bf16.msra.mxu0 0
  %618 = vmatprep.subr.bf16.mxu0 0
  %619 = vmatpush1.bf16.msra.mxu0 0
  %620 = vmatprep.subr.bf16.mxu0 0
  %621 = vmatpush1.bf16.msra.mxu0 0
  %622 = vmatprep.subr.bf16.mxu0 0
  %623 = vmatpush1.bf16.msra.mxu0 0
  %624 = vmatprep.subr.bf16.mxu0 0
  %625 = vmatpush1.bf16.msra.mxu0 0
  %626 = vmatprep.subr.bf16.mxu0 0
  %627 = vmatpush1.bf16.msra.mxu0 0
  %628 = vmatprep.subr.bf16.mxu0 0
  %629 = vmatpush1.bf16.msra.mxu0 0
  %630 = vmatprep.subr.bf16.mxu0 0
  %631 = vmatpush1.bf16.msra.mxu0 0
  %632 = vmatprep.subr.bf16.mxu0 0
  %633 = vmatpush1.bf16.msra.mxu0 0
  %634 = vmatprep.subr.bf16.mxu0 0
  %635 = vmatpush1.bf16.msra.mxu0 0
  %636 = vmatprep.subr.bf16.mxu0 0
  %637 = vmatpush1.bf16.msra.mxu0 0
  %638 = vmatprep.subr.bf16.mxu0 0
  %639 = vmatpush1.bf16.msra.mxu0 0
  %640 = vmatprep.mubr.bf16.mxu0 0
  %641 = vmatmul.mubr.bf16.gmra.mrb[0].mxu0 %v606
  %v642 = vpop.f32.mrb[0].mxu0
  %v643 = vadd.f32 0.0, %v642
  %v644 = vpop.f32.mrb[0].mxu0
  %v645 = vpop.f32.mrb[0].mxu0
  %v646 = vpop.f32.mrb[0].mxu0
  %647 = vdwg.mxu0
  %v648 = vadd.f32 %v600, %v643
  %v649 = vmul.f32 %v648, %v179
  %v650 = vxor.u32 %v649, 2147483648
  %v651 = vmul.f32 %v650, 1.442695
  %v652 = vpow.pop %v651
  %v653 = vadd.f32 %v652, 1.0
  %v654 = vrcp.pop %v653
  %v655 = vmul.f32 1.0, %v654
  %v656 = vmul.f32 %v655, 2.0
  %v657 = vsub.f32 %v656, 1.0
  %v658 = vsel %vm178, %v657, %v655
  %v659 = vmul.f32 %v658, %v588
  %661 = vrot.lane.b32.xlu0 %v658, 64
  %v662 = vpop.permute.xlu0 %661
  %v664 = vmul.f32 %v658, %v662
  %666 = vrot.lane.b32.xlu0 %v664, 32
  %v667 = vpop.permute.xlu0 %666
  %v669 = vadd.f32 %v659, %v667
  %v670 = vtanh.pop %v669
  %672 = vrot.lane.b32.xlu0 %v670, 64
  %v673 = vpop.permute.xlu0 %672
  %v675 = vmul.f32 %v658, %v673
  %677 = vrot.lane.b32.xlu0 %v675, 32
  %v678 = vpop.permute.xlu0 %677
  %680 = vst.msk [vmem:[#allocation3 + $0x28] sm:$0xff] %vm88, %v678
  %v681 = vld [vmem:[#allocation2 + $0x30] sm:$0xff]
  %v682 = vpack.c.bf16 %v675, %v675
  %684 = vrot.lane.b32.xlu0 %v682, 32
  %v685 = vpop.permute.xlu0 %684
  %v687 = vsel %vm88, %v685, 0
  %689 = vmatprep.subr.bf16.mxu0 0
  %690 = vmatpush1.bf16.msra.mxu0 %v192
  %691 = vmatprep.subr.bf16.mxu0 0
  %692 = vmatpush1.bf16.msra.mxu0 %v193
  %693 = vmatprep.subr.bf16.mxu0 0
  %694 = vmatpush1.bf16.msra.mxu0 0
  %695 = vmatprep.subr.bf16.mxu0 0
  %696 = vmatpush1.bf16.msra.mxu0 0
  %697 = vmatprep.subr.bf16.mxu0 0
  %698 = vmatpush1.bf16.msra.mxu0 0
  %699 = vmatprep.subr.bf16.mxu0 0
  %700 = vmatpush1.bf16.msra.mxu0 0
  %701 = vmatprep.subr.bf16.mxu0 0
  %702 = vmatpush1.bf16.msra.mxu0 0
  %703 = vmatprep.subr.bf16.mxu0 0
  %704 = vmatpush1.bf16.msra.mxu0 0
  %705 = vmatprep.subr.bf16.mxu0 0
  %706 = vmatpush1.bf16.msra.mxu0 0
  %707 = vmatprep.subr.bf16.mxu0 0
  %708 = vmatpush1.bf16.msra.mxu0 0
  %709 = vmatprep.subr.bf16.mxu0 0
  %710 = vmatpush1.bf16.msra.mxu0 0
  %711 = vmatprep.subr.bf16.mxu0 0
  %712 = vmatpush1.bf16.msra.mxu0 0
  %713 = vmatprep.subr.bf16.mxu0 0
  %714 = vmatpush1.bf16.msra.mxu0 0
  %715 = vmatprep.subr.bf16.mxu0 0
  %716 = vmatpush1.bf16.msra.mxu0 0
  %717 = vmatprep.subr.bf16.mxu0 0
  %718 = vmatpush1.bf16.msra.mxu0 0
  %719 = vmatprep.subr.bf16.mxu0 0
  %720 = vmatpush1.bf16.msra.mxu0 0
  %721 = vmatprep.mubr.bf16.mxu0 0
  %722 = vmatmul.mubr.bf16.gmra.mrb[0].mxu0 %v687
  %v723 = vpop.f32.mrb[0].mxu0
  %v724 = vadd.f32 0.0, %v723
  %v725 = vpop.f32.mrb[0].mxu0
  %v726 = vpop.f32.mrb[0].mxu0
  %v727 = vpop.f32.mrb[0].mxu0
  %728 = vdwg.mxu0
  %v729 = vadd.f32 %v681, %v724
  %v730 = vmul.f32 %v729, %v179
  %v731 = vxor.u32 %v730, 2147483648
  %v732 = vmul.f32 %v731, 1.442695
  %v733 = vpow.pop %v732
  %v734 = vadd.f32 %v733, 1.0
  %v735 = vrcp.pop %v734
  %v736 = vmul.f32 1.0, %v735
  %v737 = vmul.f32 %v736, 2.0
  %v738 = vsub.f32 %v737, 1.0
  %v739 = vsel %vm178, %v738, %v736
  %v740 = vmul.f32 %v739, %v669
  %742 = vrot.lane.b32.xlu0 %v739, 64
  %v743 = vpop.permute.xlu0 %742
  %v745 = vmul.f32 %v739, %v743
  %747 = vrot.lane.b32.xlu0 %v745, 32
  %v748 = vpop.permute.xlu0 %747
  %v750 = vadd.f32 %v740, %v748
  %v751 = vtanh.pop %v750
  %753 = vrot.lane.b32.xlu0 %v751, 64
  %v754 = vpop.permute.xlu0 %753
  %v756 = vmul.f32 %v739, %v754
  %758 = vrot.lane.b32.xlu0 %v756, 32
  %v759 = vpop.permute.xlu0 %758
  %761 = vst.msk [vmem:[#allocation3 + $0x30] sm:$0xff] %vm88, %v759
  %v762 = vld [vmem:[#allocation2 + $0x38] sm:$0xff]
  %v763 = vpack.c.bf16 %v756, %v756
  %765 = vrot.lane.b32.xlu0 %v763, 32
  %v766 = vpop.permute.xlu0 %765
  %v768 = vsel %vm88, %v766, 0
  %770 = vmatprep.subr.bf16.mxu0 0
  %771 = vmatpush1.bf16.msra.mxu0 %v192
  %772 = vmatprep.subr.bf16.mxu0 0
  %773 = vmatpush1.bf16.msra.mxu0 %v193
  %774 = vmatprep.subr.bf16.mxu0 0
  %775 = vmatpush1.bf16.msra.mxu0 0
  %776 = vmatprep.subr.bf16.mxu0 0
  %777 = vmatpush1.bf16.msra.mxu0 0
  %778 = vmatprep.subr.bf16.mxu0 0
  %779 = vmatpush1.bf16.msra.mxu0 0
  %780 = vmatprep.subr.bf16.mxu0 0
  %781 = vmatpush1.bf16.msra.mxu0 0
  %782 = vmatprep.subr.bf16.mxu0 0
  %783 = vmatpush1.bf16.msra.mxu0 0
  %784 = vmatprep.subr.bf16.mxu0 0
  %785 = vmatpush1.bf16.msra.mxu0 0
  %786 = vmatprep.subr.bf16.mxu0 0
  %787 = vmatpush1.bf16.msra.mxu0 0
  %788 = vmatprep.subr.bf16.mxu0 0
  %789 = vmatpush1.bf16.msra.mxu0 0
  %790 = vmatprep.subr.bf16.mxu0 0
  %791 = vmatpush1.bf16.msra.mxu0 0
  %792 = vmatprep.subr.bf16.mxu0 0
  %793 = vmatpush1.bf16.msra.mxu0 0
  %794 = vmatprep.subr.bf16.mxu0 0
  %795 = vmatpush1.bf16.msra.mxu0 0
  %796 = vmatprep.subr.bf16.mxu0 0
  %797 = vmatpush1.bf16.msra.mxu0 0
  %798 = vmatprep.subr.bf16.mxu0 0
  %799 = vmatpush1.bf16.msra.mxu0 0
  %800 = vmatprep.subr.bf16.mxu0 0
  %801 = vmatpush1.bf16.msra.mxu0 0
  %802 = vmatprep.mubr.bf16.mxu0 0
  %803 = vmatmul.mubr.bf16.gmra.mrb[0].mxu0 %v768
  %v804 = vpop.f32.mrb[0].mxu0
  %v805 = vadd.f32 0.0, %v804
  %v806 = vpop.f32.mrb[0].mxu0
  %v807 = vpop.f32.mrb[0].mxu0
  %v808 = vpop.f32.mrb[0].mxu0
  %809 = vdwg.mxu0
  %v810 = vadd.f32 %v762, %v805
  %v811 = vmul.f32 %v810, %v179
  %v812 = vxor.u32 %v811, 2147483648
  %v813 = vmul.f32 %v812, 1.442695
  %v814 = vpow.pop %v813
  %v815 = vadd.f32 %v814, 1.0
  %v816 = vrcp.pop %v815
  %v817 = vmul.f32 1.0, %v816
  %v818 = vmul.f32 %v817, 2.0
  %v819 = vsub.f32 %v818, 1.0
  %v820 = vsel %vm178, %v819, %v817
  %v821 = vmul.f32 %v820, %v750
  %823 = vrot.lane.b32.xlu0 %v820, 64
  %v824 = vpop.permute.xlu0 %823
  %v826 = vmul.f32 %v820, %v824
  %828 = vrot.lane.b32.xlu0 %v826, 32
  %v829 = vpop.permute.xlu0 %828
  %v831 = vadd.f32 %v821, %v829
  %v832 = vtanh.pop %v831
  %834 = vrot.lane.b32.xlu0 %v832, 64
  %v835 = vpop.permute.xlu0 %834
  %v837 = vmul.f32 %v820, %v835
  %839 = vrot.lane.b32.xlu0 %v837, 32
  %v840 = vpop.permute.xlu0 %839
  %842 = vst.msk [vmem:[#allocation3 + $0x38] sm:$0xff] %vm88, %v840
  %843 = vst.msk [vmem:[%s9] sm:$0xff] %vm88, %v840
  %845 = vrot.lane.b32.xlu0 %v831, 96
  %v846 = vpop.permute.xlu0 %845
  %848 = vst.msk [vmem:[%s10] sm:$0xff] %vm88, %v846
  %v849 = vld [vmem:[#allocation3] sm:$0xff]
  %v850 = vld [vmem:[#allocation3 + $0x8] sm:$0xff]
  %v851 = vld [vmem:[#allocation3 + $0x10] sm:$0xff]
  %v852 = vld [vmem:[#allocation3 + $0x18] sm:$0xff]
  %v853 = vld [vmem:[#allocation3 + $0x20] sm:$0xff]
  %v854 = vld [vmem:[#allocation3 + $0x28] sm:$0xff]
  %v855 = vld [vmem:[#allocation3 + $0x30] sm:$0xff]
  %v856 = vld [vmem:[#allocation3 + $0x38] sm:$0xff]
  %v857 = vpack.c.bf16 %v850, %v849
  %v858 = vpack.c.bf16 %v852, %v851
  %v859 = vpack.c.bf16 %v854, %v853
  %v860 = vpack.c.bf16 %v856, %v855
  %v861 = vld [vmem:[%s6] sm:$0xf]
  %v862 = vld [vmem:[%s6 + $0x4] sm:$0xf]
  %v863 = vld [vmem:[%s6 + $0x8] sm:$0xf]
  %v864 = vld [vmem:[%s6 + $0xc] sm:$0xf]
  %v865 = vld [vmem:[%s7] sm:$0x1]
  %v867 = vlaneseq
  %v868 = vshrl.u32 %v867, 7
  %v869 = vsub.s32 0, %v868
  %v870 = vrot.slane %v865, %v869
  %v876 = vunpack.c.l.b16 %v861
  %v877 = vunpack.c.l.b16 %v862
  %v878 = vunpack.c.l.b16 %v863
  %v879 = vunpack.c.l.b16 %v864
  %v880 = vpack.c.b16 %v877, %v876
  %v881 = vpack.c.b16 %v879, %v878
  %v885 = vsel %vm88, %v857, 0
  %v888 = vsel %vm88, %v858, 0
  %v891 = vsel %vm88, %v859, 0
  %v894 = vsel %vm88, %v860, 0
  %896 = vmatprep.subr.bf16.mxu0 0
  %897 = vmatpush1.bf16.msra.mxu0 %v880
  %898 = vmatprep.subr.bf16.mxu0 0
  %899 = vmatpush1.bf16.msra.mxu0 %v881
  %900 = vmatprep.subr.bf16.mxu0 0
  %901 = vmatpush1.bf16.msra.mxu0 0
  %902 = vmatprep.subr.bf16.mxu0 0
  %903 = vmatpush1.bf16.msra.mxu0 0
  %904 = vmatprep.subr.bf16.mxu0 0
  %905 = vmatpush1.bf16.msra.mxu0 0
  %906 = vmatprep.subr.bf16.mxu0 0
  %907 = vmatpush1.bf16.msra.mxu0 0
  %908 = vmatprep.subr.bf16.mxu0 0
  %909 = vmatpush1.bf16.msra.mxu0 0
  %910 = vmatprep.subr.bf16.mxu0 0
  %911 = vmatpush1.bf16.msra.mxu0 0
  %912 = vmatprep.subr.bf16.mxu0 0
  %913 = vmatpush1.bf16.msra.mxu0 0
  %914 = vmatprep.subr.bf16.mxu0 0
  %915 = vmatpush1.bf16.msra.mxu0 0
  %916 = vmatprep.subr.bf16.mxu0 0
  %917 = vmatpush1.bf16.msra.mxu0 0
  %918 = vmatprep.subr.bf16.mxu0 0
  %919 = vmatpush1.bf16.msra.mxu0 0
  %920 = vmatprep.subr.bf16.mxu0 0
  %921 = vmatpush1.bf16.msra.mxu0 0
  %922 = vmatprep.subr.bf16.mxu0 0
  %923 = vmatpush1.bf16.msra.mxu0 0
  %924 = vmatprep.subr.bf16.mxu0 0
  %925 = vmatpush1.bf16.msra.mxu0 0
  %926 = vmatprep.subr.bf16.mxu0 0
  %927 = vmatpush1.bf16.msra.mxu0 0
  %928 = vmatprep.mubr.bf16.mxu0 0
  %929 = vmatmul.mubr.bf16.gmra.mrb[0].mxu0 %v885
  %v930 = vpop.f32.mrb[0].mxu0
  %v931 = vadd.f32 %v870, %v930
  %v932 = vpop.f32.mrb[0].mxu0
  %v933 = vpop.f32.mrb[0].mxu0
  %v934 = vadd.f32 %v870, %v933
  %v935 = vpop.f32.mrb[0].mxu0
  %936 = vmatprep.mubr.bf16.mxu0 0
  %937 = vmatmul.mubr.bf16.gmra.mrb[0].mxu0 %v888
  %v938 = vpop.f32.mrb[0].mxu0
  %v939 = vadd.f32 %v870, %v938
  %v940 = vpop.f32.mrb[0].mxu0
  %v941 = vpop.f32.mrb[0].mxu0
  %v942 = vadd.f32 %v870, %v941
  %v943 = vpop.f32.mrb[0].mxu0
  %944 = vmatprep.mubr.bf16.mxu0 0
  %945 = vmatmul.mubr.bf16.gmra.mrb[0].mxu0 %v891
  %v946 = vpop.f32.mrb[0].mxu0
  %v947 = vadd.f32 %v870, %v946
  %v948 = vpop.f32.mrb[0].mxu0
  %v949 = vpop.f32.mrb[0].mxu0
  %v950 = vadd.f32 %v870, %v949
  %v951 = vpop.f32.mrb[0].mxu0
  %952 = vmatprep.mubr.bf16.mxu0 0
  %953 = vmatmul.mubr.bf16.gmra.mrb[0].mxu0 %v894
  %v954 = vpop.f32.mrb[0].mxu0
  %v955 = vadd.f32 %v870, %v954
  %v956 = vpop.f32.mrb[0].mxu0
  %v957 = vpop.f32.mrb[0].mxu0
  %v958 = vadd.f32 %v870, %v957
  %v959 = vpop.f32.mrb[0].mxu0
  %960 = vdwg.mxu0
  %961 = vmax.xlane.f32.xlu0 %v931
  %v962 = vpop.xlane.xlu0 %961
  %963 = vmax.xlane.f32.xlu0 %v934
  %v964 = vpop.xlane.xlu0 %963
  %965 = vmax.xlane.f32.xlu0 %v939
  %v966 = vpop.xlane.xlu0 %965
  %967 = vmax.xlane.f32.xlu0 %v942
  %v968 = vpop.xlane.xlu0 %967
  %969 = vmax.xlane.f32.xlu0 %v947
  %v970 = vpop.xlane.xlu0 %969
  %971 = vmax.xlane.f32.xlu0 %v950
  %v972 = vpop.xlane.xlu0 %971
  %973 = vmax.xlane.f32.xlu0 %v955
  %v974 = vpop.xlane.xlu0 %973
  %975 = vmax.xlane.f32.xlu0 %v958
  %v976 = vpop.xlane.xlu0 %975
  %v977 = vsub.f32 %v931, %v962
  %v978 = vsub.f32 %v934, %v964
  %v979 = vsub.f32 %v939, %v966
  %v980 = vsub.f32 %v942, %v968
  %v981 = vsub.f32 %v947, %v970
  %v982 = vsub.f32 %v950, %v972
  %v983 = vsub.f32 %v955, %v974
  %v984 = vsub.f32 %v958, %v976
  %v985 = vmul.f32 %v977, 1.442695
  %v986 = vpow.pop %v985
  %v987 = vmul.f32 %v978, 1.442695
  %v988 = vpow.pop %v987
  %v989 = vmul.f32 %v979, 1.442695
  %v990 = vpow.pop %v989
  %v991 = vmul.f32 %v980, 1.442695
  %v992 = vpow.pop %v991
  %v993 = vmul.f32 %v981, 1.442695
  %v994 = vpow.pop %v993
  %v995 = vmul.f32 %v982, 1.442695
  %v996 = vpow.pop %v995
  %v997 = vmul.f32 %v983, 1.442695
  %v998 = vpow.pop %v997
  %v999 = vmul.f32 %v984, 1.442695
  %v1000 = vpow.pop %v999
  %1001 = vadd.xlane.f32.xlu0 %v986
  %v1002 = vpop.xlane.xlu0 %1001
  %1003 = vadd.xlane.f32.xlu0 %v988
  %v1004 = vpop.xlane.xlu0 %1003
  %1005 = vadd.xlane.f32.xlu0 %v990
  %v1006 = vpop.xlane.xlu0 %1005
  %1007 = vadd.xlane.f32.xlu0 %v992
  %v1008 = vpop.xlane.xlu0 %1007
  %1009 = vadd.xlane.f32.xlu0 %v994
  %v1010 = vpop.xlane.xlu0 %1009
  %1011 = vadd.xlane.f32.xlu0 %v996
  %v1012 = vpop.xlane.xlu0 %1011
  %1013 = vadd.xlane.f32.xlu0 %v998
  %v1014 = vpop.xlane.xlu0 %1013
  %1015 = vadd.xlane.f32.xlu0 %v1000
  %v1016 = vpop.xlane.xlu0 %1015
  %v1017 = vlog2.pop %v1002
  %v1018 = vmul.f32 %v1017, 0.6931472
  %v1019 = vlog2.pop %v1004
  %v1020 = vmul.f32 %v1019, 0.6931472
  %v1021 = vlog2.pop %v1006
  %v1022 = vmul.f32 %v1021, 0.6931472
  %v1023 = vlog2.pop %v1008
  %v1024 = vmul.f32 %v1023, 0.6931472
  %v1025 = vlog2.pop %v1010
  %v1026 = vmul.f32 %v1025, 0.6931472
  %v1027 = vlog2.pop %v1012
  %v1028 = vmul.f32 %v1027, 0.6931472
  %v1029 = vlog2.pop %v1014
  %v1030 = vmul.f32 %v1029, 0.6931472
  %v1031 = vlog2.pop %v1016
  %v1032 = vmul.f32 %v1031, 0.6931472
  %v1033 = vsub.f32 %v977, %v1018
  %v1034 = vsub.f32 %v978, %v1020
  %v1035 = vsub.f32 %v979, %v1022
  %v1036 = vsub.f32 %v980, %v1024
  %v1037 = vsub.f32 %v981, %v1026
  %v1038 = vsub.f32 %v982, %v1028
  %v1039 = vsub.f32 %v983, %v1030
  %v1040 = vsub.f32 %v984, %v1032
  %1041 = vst [vmem:[%s8] sm:$0xff] %v1033
  %1042 = vst [vmem:[%s8 + $0x8] sm:$0xff] %v1034
  %1043 = vst [vmem:[%s8 + $0x10] sm:$0xff] %v1035
  %1044 = vst [vmem:[%s8 + $0x18] sm:$0xff] %v1036
  %1045 = vst [vmem:[%s8 + $0x20] sm:$0xff] %v1037
  %1046 = vst [vmem:[%s8 + $0x28] sm:$0xff] %v1038
  %1047 = vst [vmem:[%s8 + $0x30] sm:$0xff] %v1039
  %1048 = vst [vmem:[%s8 + $0x38] sm:$0xff] %v1040
  // Predicated region
  $region34: #{lstm_network_forward.1} parent=0 // pred_check
    _
  $region35: #{lstm_network_forward.1} parent=0 // pred_check_branch
    %1050 = sbr.rel (0) target = $region37
  $region36: #{lstm_network_forward.1} parent=0 // pred_region
    _
  $region37: #{lstm_network_forward.1} parent=0 // pred_fallthru
    _
  // Predicated region
  $region38: #{lstm_network_forward.1} parent=0 // pred_check
    _
  $region39: #{lstm_network_forward.1} parent=0 // pred_check_branch
    %1052 = sbr.rel (0) target = $region41
  $region40: #{lstm_network_forward.1} parent=0 // pred_region
    _
  $region41: #{lstm_network_forward.1} parent=0 // pred_fallthru
    _
  // Predicated region
  $region42: #{lstm_network_forward.1} parent=0 // pred_check
    _
  $region43: #{lstm_network_forward.1} parent=0 // pred_check_branch
    %1054 = sbr.rel (0) target = $region45
  $region44: #{lstm_network_forward.1} parent=0 // pred_region
    _
  $region45: #{lstm_network_forward.1} parent=0 // pred_fallthru
    _
  // Predicated region
  $region46: #{lstm_network_forward.1} parent=0 // pred_check
    _
  $region47: #{lstm_network_forward.1} parent=0 // pred_check_branch
    %1056 = sbr.rel (0) target = $region49
  $region48: #{lstm_network_forward.1} parent=0 // pred_region
    _
  $region49: #{lstm_network_forward.1} parent=0 // pred_fallthru
    _
  // Predicated region
  $region50: #{lstm_network_forward.1} parent=0 // pred_check
    _
  $region51: #{lstm_network_forward.1} parent=0 // pred_check_branch
    %1058 = sbr.rel (0) target = $region53
  $region52: #{lstm_network_forward.1} parent=0 // pred_region
    _
  $region53: #{lstm_network_forward.1} parent=0 // pred_fallthru
    _
  // Predicated region
  $region54: #{lstm_network_forward.1} parent=0 // pred_check
    _
  $region55: #{lstm_network_forward.1} parent=0 // pred_check_branch
    %1060 = sbr.rel (0) target = $region57
  $region56: #{lstm_network_forward.1} parent=0 // pred_region
    _
  $region57: #{lstm_network_forward.1} parent=0 // pred_fallthru
    _

</llo_original>
